<compile_context>
chip_gen: v7x
topology: tpu7x:2x2x1
jax: 0.10.0
libtpu: 0.0.40
codegen_flags: <defaults>
</compile_context>

<pallas_src>
import functools

import jax
import jax.numpy as jnp
from jax.experimental import pallas as pl
from jax.experimental.pallas import tpu as pltpu


def _twa_seq_kernel(k, H, W,
                    x_ref, w1x_ref, w1h_ref, b1_ref,
                    wdw_ref, b2_ref, w3_ref, b3_ref, mask_ref,
                    out_ref, h_ref):
    """One (batch, timestep) grid step of the fused ConvTWACell_DW layer.

    Layout: channels on sublanes, flattened spatial H*W on lanes.
      x_ref  : (1, 1, Cin, HW)      current frame
      h_ref  : (Ch, HW) VMEM scratch, hidden-state carry across the T axis
      out_ref: (1, 1, Ch, HW)       h_next for this (b, t)
    """
    p = (k - 1) // 2
    HW = H * W
    t = pl.program_id(1)

    # init_hidden: zeros at the start of every sequence (new batch element).
    @pl.when(t == 0)
    def _():
        h_ref[...] = jnp.zeros_like(h_ref)

    x = x_ref[0, 0].astype(jnp.float32)          # (Cin, HW)
    h = h_ref[...]                               # (Ch,  HW), f32 carry

    # --- 1x1 expand conv on cat([x, h]) (BN scale pre-folded) + ReLU6 -------
    # Transposed form: z1 = W1x @ x + W1h @ h, so MXU N = HW = 256 (lane-dense).
    z1 = (jnp.dot(w1x_ref[...], x.astype(jnp.bfloat16),
                  preferred_element_type=jnp.float32)
          + jnp.dot(w1h_ref[...], h.astype(jnp.bfloat16),
                    preferred_element_type=jnp.float32))
    z1 = jnp.clip(z1 + b1_ref[...], 0.0, 6.0)    # (Cm, HW)

    # --- kxk depthwise conv (stride 1, zero pad p) + BN bias + ReLU6 --------
    # No padded VMEM scratch: each tap is a lane roll of the flattened spatial
    # axis (XLU slot) masked by a precomputed border mask, then a per-channel
    # weight multiply-accumulate on the VPU.
    wdw = wdw_ref[...]                           # (Cm, k*k), BN scale folded
    msk = mask_ref[...]                          # (k*k, HW), 0/1 border masks
    acc = jnp.zeros_like(z1)
    idx = 0
    for dy in range(-p, p + 1):
        for dx in range(-p, p + 1):
            d = dy * W + dx
            sh = z1 if d == 0 else pltpu.roll(z1, (-d) % HW, 1)
            if not (dy == 0 and dx == 0):        # center tap mask is all-ones
                sh = sh * msk[idx:idx + 1, :]
            acc = acc + sh * wdw[:, idx:idx + 1]
            idx += 1
    z2 = jnp.clip(acc + b2_ref[...], 0.0, 6.0)   # (Cm, HW)

    # --- 1x1 project conv + BN bias + sigmoid gate --------------------------
    z3 = jnp.dot(w3_ref[...], z2.astype(jnp.bfloat16),
                 preferred_element_type=jnp.float32) + b3_ref[...]
    gate = pl.reciprocal(1.0 + jnp.exp(-z3), approx=True)   # (Ch, HW), EUP

    # h_next = i * x + (1 - i) * h  ==  h + i * (x - h)
    h_next = h + gate * (x - h)
    h_ref[...] = h_next
    out_ref[0, 0] = h_next.astype(out_ref.dtype)


def _tap_masks(k, H, W):
    """(k*k, H*W) float32 validity masks for the zero-padded depthwise taps."""
    p = (k - 1) // 2
    s = jnp.arange(H * W, dtype=jnp.int32)
    y, x = s // W, s % W
    rows = []
    for dy in range(-p, p + 1):
        for dx in range(-p, p + 1):
            valid = ((y + dy >= 0) & (y + dy < H) & (x + dx >= 0) & (x + dx < W))
            rows.append(valid.astype(jnp.float32))
    return jnp.stack(rows, axis=0)               # (k*k, HW)


def twa_layer_forward(x_seq, params, H, W):
    """Run one ConvTWACell_DW layer over a whole sequence.

    x_seq: (B, T, Cin, H*W) channels-on-sublanes / spatial-on-lanes layout.
    Returns (B, T, Ch, H*W) with all T timesteps' hidden states.
    """
    B, T, Cin, HW = x_seq.shape
    assert HW == H * W
    k = params['kernel_size']
    Ch = params['w3'].shape[0]
    assert Cin == Ch, "h_next = i*x + (1-i)*h requires input_dim == hidden_dim"

    mask = _tap_masks(k, H, W)

    def const_spec(arr):
        nd = arr.ndim
        return pl.BlockSpec(arr.shape, lambda b, t, _nd=nd: (0,) * _nd)

    kernel = functools.partial(_twa_seq_kernel, k, H, W)
    return pl.pallas_call(
        kernel,
        grid=(B, T),
        in_specs=[
            pl.BlockSpec((1, 1, Cin, HW), lambda b, t: (b, t, 0, 0)),
            const_spec(params['w1x']), const_spec(params['w1h']),
            const_spec(params['b1']),
            const_spec(params['wdw']), const_spec(params['b2']),
            const_spec(params['w3']), const_spec(params['b3']),
            const_spec(mask),
        ],
        out_specs=pl.BlockSpec((1, 1, Ch, HW), lambda b, t: (b, t, 0, 0)),
        out_shape=jax.ShapeDtypeStruct((B, T, Ch, HW), x_seq.dtype),
        scratch_shapes=[pltpu.VMEM((Ch, HW), jnp.float32)],   # hidden-state carry
        compiler_params=pltpu.CompilerParams(
            dimension_semantics=("parallel", "arbitrary")),
    )(x_seq,
      params['w1x'], params['w1h'], params['b1'],
      params['wdw'], params['b2'],
      params['w3'], params['b3'], mask)


def init_cell_params(key, input_dim, hidden_dim, kernel_size):
    """Parameters matching ConvTWACell_DW (expand_ratio=4, conv bias=False).

    Conv weights: kaiming_normal(mode='fan_out') like init_weights().
    BatchNorm: weight=1, bias=0, running_mean=0, running_var=1 (inference
    affine); the per-channel scale is folded into the conv weights here.
    Weights feeding the MXU are stored in bfloat16 (f32 accumulation in-kernel).
    """
    c_all = input_dim + hidden_dim
    cm = 4 * c_all                        # expand_ratio = 4
    k = kernel_size
    eps = 1e-5
    k1, k2, k3 = jax.random.split(key, 3)

    # PyTorch Conv2d weight layouts, kept transposed as (out_ch, in_ch[*k*k]).
    w1 = jax.random.normal(k1, (cm, c_all), jnp.float32) * jnp.sqrt(2.0 / cm)
    wdw = jax.random.normal(k2, (cm, k * k), jnp.float32) * jnp.sqrt(
        2.0 / (cm * k * k))
    w3 = jax.random.normal(k3, (hidden_dim, cm), jnp.float32) * jnp.sqrt(
        2.0 / hidden_dim)

    bn_scale = 1.0 / jnp.sqrt(1.0 + eps)   # gamma / sqrt(running_var + eps)
    s1 = jnp.full((cm, 1), bn_scale, jnp.float32)
    s2 = jnp.full((cm, 1), bn_scale, jnp.float32)
    s3 = jnp.full((hidden_dim, 1), bn_scale, jnp.float32)

    w1f = w1 * s1                         # fold BN scale into conv weights
    wdwf = wdw * s2
    w3f = w3 * s3

    return dict(
        kernel_size=kernel_size,
        w1x=w1f[:, :input_dim].astype(jnp.bfloat16),   # (Cm, Cin)
        w1h=w1f[:, input_dim:].astype(jnp.bfloat16),   # (Cm, Ch)
        b1=jnp.zeros((cm, 1), jnp.float32),
        wdw=wdwf,                                      # (Cm, k*k) f32 (VPU taps)
        b2=jnp.zeros((cm, 1), jnp.float32),
        w3=w3f.astype(jnp.bfloat16),                   # (Ch, Cm)
        b3=jnp.zeros((hidden_dim, 1), jnp.float32),
    )


def conv_twa_dw_forward(input_tensor, layer_params, batch_first=False,
                        return_all_layers=False):
    """ConvTWA_DW.forward.

    input_tensor: (t, b, c, h, w) if not batch_first else (b, t, c, h, w).
    Returns (layer_output, last_state) like the PyTorch module with
    return_all_layers=False: layer_output (b, t, hidden, h, w),
    last_state = [h_last] with h_last (b, hidden, h, w).
    """
    if not batch_first:
        input_tensor = jnp.transpose(input_tensor, (1, 0, 2, 3, 4))
    B, T, C, H, W = input_tensor.shape
    # Channels-first flattened-spatial layout == NCHW reshaped; no transposes
    # are needed around the kernel (spatial stays on the lane axis throughout).
    cur = input_tensor.reshape(B, T, C, H * W)

    layer_output_list = []
    last_state_list = []
    for params in layer_params:
        cur = twa_layer_forward(cur, params, H, W)       # (B, T, Ch, HW)
        Ch = cur.shape[2]
        layer_output_list.append(cur.reshape(B, T, Ch, H, W))
        last_state_list.append([cur[:, -1].reshape(B, Ch, H, W)])

    if not return_all_layers:
        return layer_output_list[-1], last_state_list[-1]
    return layer_output_list, last_state_list


if __name__ == "__main__":
    key = jax.random.PRNGKey(0)
    T, B = 8, 2
    H, W = 16, 16
    input_dim = 4
    hidden_dim = 4          # must equal input_dim for h_next = i*x + (1-i)*h
    num_layers = 2
    kernel_size = 3

    kx, kp = jax.random.split(key)
    # PyTorch default batch_first=False -> (t, b, c, h, w)
    x = jax.random.normal(kx, (T, B, input_dim, H, W), jnp.float32)

    params = []
    for layer in range(num_layers):
        kp, kl = jax.random.split(kp)
        c_in = input_dim if layer == 0 else hidden_dim
        params.append(init_cell_params(kl, c_in, hidden_dim, kernel_size))

    layer_output, last_state = conv_twa_dw_forward(x, params)
    layer_output = jax.block_until_ready(layer_output)
    last_h = jax.block_until_ready(last_state[0])

    assert layer_output.shape == (B, T, hidden_dim, H, W), layer_output.shape
    assert last_h.shape == (B, hidden_dim, H, W), last_h.shape
    assert bool(jnp.all(jnp.isfinite(layer_output)))
    print("KERNEL_OK")
</pallas_src>

<mosaic_0001>
module attributes {stable_mosaic.version = 11 : i64} {
  func.func @_twa_seq_kernel(%arg0: i32, %arg1: i32, %arg2: memref<1x1x4x256xf32, #tpu.memory_space<vmem>>, %arg3: memref<32x4xbf16, #tpu.memory_space<vmem>>, %arg4: memref<32x4xbf16, #tpu.memory_space<vmem>>, %arg5: memref<32x1xf32, #tpu.memory_space<vmem>>, %arg6: memref<32x9xf32, #tpu.memory_space<vmem>>, %arg7: memref<32x1xf32, #tpu.memory_space<vmem>>, %arg8: memref<4x32xbf16, #tpu.memory_space<vmem>>, %arg9: memref<4x1xf32, #tpu.memory_space<vmem>>, %arg10: memref<9x256xf32, #tpu.memory_space<vmem>>, %arg11: memref<1x1x4x256xf32, #tpu.memory_space<vmem>>, %arg12: memref<4x256xf32, #tpu.memory_space<vmem>>) attributes {dimension_semantics = [#tpu.dimension_semantics<parallel>, #tpu.dimension_semantics<arbitrary>], iteration_bounds = array<i64: 2, 8>, scalar_prefetch = 0 : i64, scratch_operands = 1 : i64, tpu.core_type = #tpu.core_type<tc>, window_params = [{transform_indices = @transform_0, window_bounds = array<i64: 1, 1, 4, 256>}, {pipeline_mode = #tpu.pipeline_mode<synchronous>, transform_indices = @transform_1, window_bounds = array<i64: 32, 4>}, {pipeline_mode = #tpu.pipeline_mode<synchronous>, transform_indices = @transform_2, window_bounds = array<i64: 32, 4>}, {pipeline_mode = #tpu.pipeline_mode<synchronous>, transform_indices = @transform_3, window_bounds = array<i64: 32, 1>}, {pipeline_mode = #tpu.pipeline_mode<synchronous>, transform_indices = @transform_4, window_bounds = array<i64: 32, 9>}, {pipeline_mode = #tpu.pipeline_mode<synchronous>, transform_indices = @transform_5, window_bounds = array<i64: 32, 1>}, {pipeline_mode = #tpu.pipeline_mode<synchronous>, transform_indices = @transform_6, window_bounds = array<i64: 4, 32>}, {pipeline_mode = #tpu.pipeline_mode<synchronous>, transform_indices = @transform_7, window_bounds = array<i64: 4, 1>}, {pipeline_mode = #tpu.pipeline_mode<synchronous>, transform_indices = @transform_8, window_bounds = array<i64: 9, 256>}, {transform_indices = @transform_9, window_bounds = array<i64: 1, 1, 4, 256>}]} {
    %c0_i32 = arith.constant 0 : i32
    %0 = arith.cmpi eq, %arg1, %c0_i32 : i32
    %1 = arith.extui %0 : i1 to i32
    %c0_i32_0 = arith.constant 0 : i32
    %2 = arith.cmpi ne, %1, %c0_i32_0 : i32
    scf.if %2 {
      %cst_37 = arith.constant 0.000000e+00 : f32
      %117 = vector.broadcast %cst_37 : f32 to vector<4x256xf32>
      %c0_38 = arith.constant 0 : index
      %c0_39 = arith.constant 0 : index
      %118 = vector.load %arg12[%c0_38, %c0_39] : memref<4x256xf32, #tpu.memory_space<vmem>>, vector<4x256xf32>
      tpu.vector_store %arg12[%c0_38, %c0_39], %117 {strides = array<i32>} : memref<4x256xf32, #tpu.memory_space<vmem>>, vector<4x256xf32>,
    } else {
    }
    %c0 = arith.constant 0 : index
    %c0_1 = arith.constant 0 : index
    %c0_2 = arith.constant 0 : index
    %c0_3 = arith.constant 0 : index
    %3 = vector.load %arg2[%c0, %c0_1, %c0_2, %c0_3] : memref<1x1x4x256xf32, #tpu.memory_space<vmem>>, vector<1x1x4x256xf32>
    %4 = vector.shape_cast %3 : vector<1x1x4x256xf32> to vector<4x256xf32>
    %c0_4 = arith.constant 0 : index
    %c0_5 = arith.constant 0 : index
    %5 = vector.load %arg12[%c0_4, %c0_5] : memref<4x256xf32, #tpu.memory_space<vmem>>, vector<4x256xf32>
    %c0_6 = arith.constant 0 : index
    %c0_7 = arith.constant 0 : index
    %6 = vector.load %arg3[%c0_6, %c0_7] : memref<32x4xbf16, #tpu.memory_space<vmem>>, vector<32x4xbf16>
    %7 = arith.truncf %4 : vector<4x256xf32> to vector<4x256xbf16>
    %cst = arith.constant dense<0.000000e+00> : vector<32x256xf32>
    %8 = tpu.matmul %6, %7, %cst {dimension_numbers = #tpu.dot_dimension_numbers<[1], [0], [0], [1], [0, 0, 1, 1], [], []>} : vector<32x4xbf16>, vector<4x256xbf16>, vector<32x256xf32> -> vector<32x256xf32>
    %c0_8 = arith.constant 0 : index
    %c0_9 = arith.constant 0 : index
    %9 = vector.load %arg4[%c0_8, %c0_9] : memref<32x4xbf16, #tpu.memory_space<vmem>>, vector<32x4xbf16>
    %10 = arith.truncf %5 : vector<4x256xf32> to vector<4x256xbf16>
    %cst_10 = arith.constant dense<0.000000e+00> : vector<32x256xf32>
    %11 = tpu.matmul %9, %10, %cst_10 {dimension_numbers = #tpu.dot_dimension_numbers<[1], [0], [0], [1], [0, 0, 1, 1], [], []>} : vector<32x4xbf16>, vector<4x256xbf16>, vector<32x256xf32> -> vector<32x256xf32>
    %12 = arith.addf %8, %11 : vector<32x256xf32>
    %c0_11 = arith.constant 0 : index
    %c0_12 = arith.constant 0 : index
    %13 = vector.load %arg5[%c0_11, %c0_12] : memref<32x1xf32, #tpu.memory_space<vmem>>, vector<32x1xf32>
    %14 = vector.broadcast %13 : vector<32x1xf32> to vector<32x256xf32>
    %15 = arith.addf %12, %14 : vector<32x256xf32>
    %cst_13 = arith.constant 0.000000e+00 : f32
    %cst_14 = arith.constant 6.000000e+00 : f32
    %16 = vector.broadcast %cst_13 : f32 to vector<32x256xf32>
    %17 = arith.maximumf %16, %15 : vector<32x256xf32>
    %18 = vector.broadcast %cst_14 : f32 to vector<32x256xf32>
    %19 = arith.minimumf %18, %17 : vector<32x256xf32>
    %c0_15 = arith.constant 0 : index
    %c0_16 = arith.constant 0 : index
    %20 = vector.load %arg6[%c0_15, %c0_16] : memref<32x9xf32, #tpu.memory_space<vmem>>, vector<32x9xf32>
    %c0_17 = arith.constant 0 : index
    %c0_18 = arith.constant 0 : index
    %21 = vector.load %arg10[%c0_17, %c0_18] : memref<9x256xf32, #tpu.memory_space<vmem>>, vector<9x256xf32>
    %cst_19 = arith.constant 0.000000e+00 : f32
    %22 = vector.broadcast %cst_19 : f32 to vector<32x256xf32>
    %c17_i32 = arith.constant 17 : i32
    %23 = tpu.dynamic_rotate %19 by %c17_i32 dim 1 : vector<32x256xf32>, i32 -> vector<32x256xf32>
    %24 = vector.extract_strided_slice %21 {offsets = [0, 0], sizes = [1, 256], strides = [1, 1]} : vector<9x256xf32> to vector<1x256xf32>
    %25 = vector.broadcast %24 : vector<1x256xf32> to vector<32x256xf32>
    %26 = arith.mulf %23, %25 : vector<32x256xf32>
    %27 = vector.extract_strided_slice %20 {offsets = [0, 0], sizes = [32, 1], strides = [1, 1]} : vector<32x9xf32> to vector<32x1xf32>
    %28 = vector.broadcast %27 : vector<32x1xf32> to vector<32x256xf32>
    %29 = arith.mulf %26, %28 : vector<32x256xf32>
    %30 = arith.addf %22, %29 : vector<32x256xf32>
    %c16_i32 = arith.constant 16 : i32
    %31 = tpu.dynamic_rotate %19 by %c16_i32 dim 1 : vector<32x256xf32>, i32 -> vector<32x256xf32>
    %32 = vector.extract_strided_slice %21 {offsets = [1, 0], sizes = [1, 256], strides = [1, 1]} : vector<9x256xf32> to vector<1x256xf32>
    %33 = vector.broadcast %32 : vector<1x256xf32> to vector<32x256xf32>
    %34 = arith.mulf %31, %33 : vector<32x256xf32>
    %35 = vector.extract_strided_slice %20 {offsets = [0, 1], sizes = [32, 1], strides = [1, 1]} : vector<32x9xf32> to vector<32x1xf32>
    %36 = vector.broadcast %35 : vector<32x1xf32> to vector<32x256xf32>
    %37 = arith.mulf %34, %36 : vector<32x256xf32>
    %38 = arith.addf %30, %37 : vector<32x256xf32>
    %c15_i32 = arith.constant 15 : i32
    %39 = tpu.dynamic_rotate %19 by %c15_i32 dim 1 : vector<32x256xf32>, i32 -> vector<32x256xf32>
    %40 = vector.extract_strided_slice %21 {offsets = [2, 0], sizes = [1, 256], strides = [1, 1]} : vector<9x256xf32> to vector<1x256xf32>
    %41 = vector.broadcast %40 : vector<1x256xf32> to vector<32x256xf32>
    %42 = arith.mulf %39, %41 : vector<32x256xf32>
    %43 = vector.extract_strided_slice %20 {offsets = [0, 2], sizes = [32, 1], strides = [1, 1]} : vector<32x9xf32> to vector<32x1xf32>
    %44 = vector.broadcast %43 : vector<32x1xf32> to vector<32x256xf32>
    %45 = arith.mulf %42, %44 : vector<32x256xf32>
    %46 = arith.addf %38, %45 : vector<32x256xf32>
    %c1_i32 = arith.constant 1 : i32
    %47 = tpu.dynamic_rotate %19 by %c1_i32 dim 1 : vector<32x256xf32>, i32 -> vector<32x256xf32>
    %48 = vector.extract_strided_slice %21 {offsets = [3, 0], sizes = [1, 256], strides = [1, 1]} : vector<9x256xf32> to vector<1x256xf32>
    %49 = vector.broadcast %48 : vector<1x256xf32> to vector<32x256xf32>
    %50 = arith.mulf %47, %49 : vector<32x256xf32>
    %51 = vector.extract_strided_slice %20 {offsets = [0, 3], sizes = [32, 1], strides = [1, 1]} : vector<32x9xf32> to vector<32x1xf32>
    %52 = vector.broadcast %51 : vector<32x1xf32> to vector<32x256xf32>
    %53 = arith.mulf %50, %52 : vector<32x256xf32>
    %54 = arith.addf %46, %53 : vector<32x256xf32>
    %55 = vector.extract_strided_slice %20 {offsets = [0, 4], sizes = [32, 1], strides = [1, 1]} : vector<32x9xf32> to vector<32x1xf32>
    %56 = vector.broadcast %55 : vector<32x1xf32> to vector<32x256xf32>
    %57 = arith.mulf %19, %56 : vector<32x256xf32>
    %58 = arith.addf %54, %57 : vector<32x256xf32>
    %c255_i32 = arith.constant 255 : i32
    %59 = tpu.dynamic_rotate %19 by %c255_i32 dim 1 : vector<32x256xf32>, i32 -> vector<32x256xf32>
    %60 = vector.extract_strided_slice %21 {offsets = [5, 0], sizes = [1, 256], strides = [1, 1]} : vector<9x256xf32> to vector<1x256xf32>
    %61 = vector.broadcast %60 : vector<1x256xf32> to vector<32x256xf32>
    %62 = arith.mulf %59, %61 : vector<32x256xf32>
    %63 = vector.extract_strided_slice %20 {offsets = [0, 5], sizes = [32, 1], strides = [1, 1]} : vector<32x9xf32> to vector<32x1xf32>
    %64 = vector.broadcast %63 : vector<32x1xf32> to vector<32x256xf32>
    %65 = arith.mulf %62, %64 : vector<32x256xf32>
    %66 = arith.addf %58, %65 : vector<32x256xf32>
    %c241_i32 = arith.constant 241 : i32
    %67 = tpu.dynamic_rotate %19 by %c241_i32 dim 1 : vector<32x256xf32>, i32 -> vector<32x256xf32>
    %68 = vector.extract_strided_slice %21 {offsets = [6, 0], sizes = [1, 256], strides = [1, 1]} : vector<9x256xf32> to vector<1x256xf32>
    %69 = vector.broadcast %68 : vector<1x256xf32> to vector<32x256xf32>
    %70 = arith.mulf %67, %69 : vector<32x256xf32>
    %71 = vector.extract_strided_slice %20 {offsets = [0, 6], sizes = [32, 1], strides = [1, 1]} : vector<32x9xf32> to vector<32x1xf32>
    %72 = vector.broadcast %71 : vector<32x1xf32> to vector<32x256xf32>
    %73 = arith.mulf %70, %72 : vector<32x256xf32>
    %74 = arith.addf %66, %73 : vector<32x256xf32>
    %c240_i32 = arith.constant 240 : i32
    %75 = tpu.dynamic_rotate %19 by %c240_i32 dim 1 : vector<32x256xf32>, i32 -> vector<32x256xf32>
    %76 = vector.extract_strided_slice %21 {offsets = [7, 0], sizes = [1, 256], strides = [1, 1]} : vector<9x256xf32> to vector<1x256xf32>
    %77 = vector.broadcast %76 : vector<1x256xf32> to vector<32x256xf32>
    %78 = arith.mulf %75, %77 : vector<32x256xf32>
    %79 = vector.extract_strided_slice %20 {offsets = [0, 7], sizes = [32, 1], strides = [1, 1]} : vector<32x9xf32> to vector<32x1xf32>
    %80 = vector.broadcast %79 : vector<32x1xf32> to vector<32x256xf32>
    %81 = arith.mulf %78, %80 : vector<32x256xf32>
    %82 = arith.addf %74, %81 : vector<32x256xf32>
    %c239_i32 = arith.constant 239 : i32
    %83 = tpu.dynamic_rotate %19 by %c239_i32 dim 1 : vector<32x256xf32>, i32 -> vector<32x256xf32>
    %84 = vector.extract_strided_slice %21 {offsets = [8, 0], sizes = [1, 256], strides = [1, 1]} : vector<9x256xf32> to vector<1x256xf32>
    %85 = vector.broadcast %84 : vector<1x256xf32> to vector<32x256xf32>
    %86 = arith.mulf %83, %85 : vector<32x256xf32>
    %87 = vector.extract_strided_slice %20 {offsets = [0, 8], sizes = [32, 1], strides = [1, 1]} : vector<32x9xf32> to vector<32x1xf32>
    %88 = vector.broadcast %87 : vector<32x1xf32> to vector<32x256xf32>
    %89 = arith.mulf %86, %88 : vector<32x256xf32>
    %90 = arith.addf %82, %89 : vector<32x256xf32>
    %c0_20 = arith.constant 0 : index
    %c0_21 = arith.constant 0 : index
    %91 = vector.load %arg7[%c0_20, %c0_21] : memref<32x1xf32, #tpu.memory_space<vmem>>, vector<32x1xf32>
    %92 = vector.broadcast %91 : vector<32x1xf32> to vector<32x256xf32>
    %93 = arith.addf %90, %92 : vector<32x256xf32>
    %cst_22 = arith.constant 0.000000e+00 : f32
    %cst_23 = arith.constant 6.000000e+00 : f32
    %94 = vector.broadcast %cst_22 : f32 to vector<32x256xf32>
    %95 = arith.maximumf %94, %93 : vector<32x256xf32>
    %96 = vector.broadcast %cst_23 : f32 to vector<32x256xf32>
    %97 = arith.minimumf %96, %95 : vector<32x256xf32>
    %c0_24 = arith.constant 0 : index
    %c0_25 = arith.constant 0 : index
    %98 = vector.load %arg8[%c0_24, %c0_25] : memref<4x32xbf16, #tpu.memory_space<vmem>>, vector<4x32xbf16>
    %99 = arith.truncf %97 : vector<32x256xf32> to vector<32x256xbf16>
    %cst_26 = arith.constant dense<0.000000e+00> : vector<4x256xf32>
    %100 = tpu.matmul %98, %99, %cst_26 {dimension_numbers = #tpu.dot_dimension_numbers<[1], [0], [0], [1], [0, 0, 1, 1], [], []>} : vector<4x32xbf16>, vector<32x256xbf16>, vector<4x256xf32> -> vector<4x256xf32>
    %c0_27 = arith.constant 0 : index
    %c0_28 = arith.constant 0 : index
    %101 = vector.load %arg9[%c0_27, %c0_28] : memref<4x1xf32, #tpu.memory_space<vmem>>, vector<4x1xf32>
    %102 = vector.broadcast %101 : vector<4x1xf32> to vector<4x256xf32>
    %103 = arith.addf %100, %102 : vector<4x256xf32>
    %cst_29 = arith.constant 0.000000e+00 : f32
    %104 = vector.broadcast %cst_29 : f32 to vector<4x256xf32>
    %105 = arith.subf %104, %103 : vector<4x256xf32>
    %106 = math.exp %105 : vector<4x256xf32>
    %cst_30 = arith.constant 1.000000e+00 : f32
    %107 = vector.broadcast %cst_30 : f32 to vector<4x256xf32>
    %108 = arith.addf %107, %106 : vector<4x256xf32>
    %109 = tpu.reciprocal %108 {approx = true} : vector<4x256xf32> -> vector<4x256xf32>
    %110 = arith.subf %4, %5 : vector<4x256xf32>
    %111 = arith.mulf %109, %110 : vector<4x256xf32>
    %112 = arith.addf %5, %111 : vector<4x256xf32>
    %c0_31 = arith.constant 0 : index
    %c0_32 = arith.constant 0 : index
    %113 = vector.load %arg12[%c0_31, %c0_32] : memref<4x256xf32, #tpu.memory_space<vmem>>, vector<4x256xf32>
    tpu.vector_store %arg12[%c0_31, %c0_32], %112 {strides = array<i32>} : memref<4x256xf32, #tpu.memory_space<vmem>>, vector<4x256xf32>,
    %c0_33 = arith.constant 0 : index
    %c0_34 = arith.constant 0 : index
    %c0_35 = arith.constant 0 : index
    %c0_36 = arith.constant 0 : index
    %114 = vector.load %arg11[%c0_33, %c0_34, %c0_35, %c0_36] : memref<1x1x4x256xf32, #tpu.memory_space<vmem>>, vector<1x1x4x256xf32>
    %115 = vector.shape_cast %114 : vector<1x1x4x256xf32> to vector<4x256xf32>
    %116 = vector.shape_cast %112 : vector<4x256xf32> to vector<1x1x4x256xf32>
    tpu.vector_store %arg11[%c0_33, %c0_34, %c0_35, %c0_36], %116 {strides = array<i32>} : memref<1x1x4x256xf32, #tpu.memory_space<vmem>>, vector<1x1x4x256xf32>,
    return
  }
  func.func @transform_0(%arg0: i32, %arg1: i32) -> (i32, i32, i32, i32) {
    %c0_i32 = arith.constant 0 : i32
    %c0_i32_0 = arith.constant 0 : i32
    %c0_i32_1 = arith.constant 0 : i32
    return %arg0, %arg1, %c0_i32, %c0_i32_0 : i32, i32, i32, i32
  }
  func.func @transform_1(%arg0: i32, %arg1: i32) -> (i32, i32) {
    %c0_i32 = arith.constant 0 : i32
    %c0_i32_0 = arith.constant 0 : i32
    %c0_i32_1 = arith.constant 0 : i32
    return %c0_i32, %c0_i32_0 : i32, i32
  }
  func.func @transform_2(%arg0: i32, %arg1: i32) -> (i32, i32) {
    %c0_i32 = arith.constant 0 : i32
    %c0_i32_0 = arith.constant 0 : i32
    %c0_i32_1 = arith.constant 0 : i32
    return %c0_i32, %c0_i32_0 : i32, i32
  }
  func.func @transform_3(%arg0: i32, %arg1: i32) -> (i32, i32) {
    %c0_i32 = arith.constant 0 : i32
    %c0_i32_0 = arith.constant 0 : i32
    %c0_i32_1 = arith.constant 0 : i32
    return %c0_i32, %c0_i32_0 : i32, i32
  }
  func.func @transform_4(%arg0: i32, %arg1: i32) -> (i32, i32) {
    %c0_i32 = arith.constant 0 : i32
    %c0_i32_0 = arith.constant 0 : i32
    %c0_i32_1 = arith.constant 0 : i32
    return %c0_i32, %c0_i32_0 : i32, i32
  }
  func.func @transform_5(%arg0: i32, %arg1: i32) -> (i32, i32) {
    %c0_i32 = arith.constant 0 : i32
    %c0_i32_0 = arith.constant 0 : i32
    %c0_i32_1 = arith.constant 0 : i32
    return %c0_i32, %c0_i32_0 : i32, i32
  }
  func.func @transform_6(%arg0: i32, %arg1: i32) -> (i32, i32) {
    %c0_i32 = arith.constant 0 : i32
    %c0_i32_0 = arith.constant 0 : i32
    %c0_i32_1 = arith.constant 0 : i32
    return %c0_i32, %c0_i32_0 : i32, i32
  }
  func.func @transform_7(%arg0: i32, %arg1: i32) -> (i32, i32) {
    %c0_i32 = arith.constant 0 : i32
    %c0_i32_0 = arith.constant 0 : i32
    %c0_i32_1 = arith.constant 0 : i32
    return %c0_i32, %c0_i32_0 : i32, i32
  }
  func.func @transform_8(%arg0: i32, %arg1: i32) -> (i32, i32) {
    %c0_i32 = arith.constant 0 : i32
    %c0_i32_0 = arith.constant 0 : i32
    %c0_i32_1 = arith.constant 0 : i32
    return %c0_i32, %c0_i32_0 : i32, i32
  }
  func.func @transform_9(%arg0: i32, %arg1: i32) -> (i32, i32, i32, i32) {
    %c0_i32 = arith.constant 0 : i32
    %c0_i32_0 = arith.constant 0 : i32
    %c0_i32_1 = arith.constant 0 : i32
    return %arg0, %arg1, %c0_i32, %c0_i32_0 : i32, i32, i32, i32
  }
}

</mosaic_0001>

<llo_original>
// kernel: tpu_custom_call.1
$region0: #{tpu_custom_call.1}
  #allocation0 [shape = 'u32[]', space=smem, size = 0x4, offset = 0x4, fixed_abs, tag = 'smem constant byte address 0x4 - core index']
  #allocation1 [shape = 'u32[144,128]{1,0:T(1,128)}', space=vmem, size = 0x12000, scoped, tag = 'internal scratch']
  #allocation2 [shape = 'f32[4,256]{1,0:T(4,128)}', space=vmem, size = 0x1000, scoped, tag = 'scratch operand']
  %s0 = inlined_call_operand.vmem [shape: f32[2,8,4,256], index: 0, kind: input, shape index: {}]
  %s1 = inlined_call_operand.vmem [shape: bf16[32,4], index: 1, kind: input, shape index: {}]
  %s2 = inlined_call_operand.vmem [shape: bf16[32,4], index: 2, kind: input, shape index: {}]
  %s3 = inlined_call_operand.vmem [shape: f32[32,1], index: 3, kind: input, shape index: {}]
  %s4 = inlined_call_operand.vmem [shape: f32[32,9], index: 4, kind: input, shape index: {}]
  %s5 = inlined_call_operand.vmem [shape: f32[32,1], index: 5, kind: input, shape index: {}]
  %s6 = inlined_call_operand.vmem [shape: bf16[4,32], index: 6, kind: input, shape index: {}]
  %s7 = inlined_call_operand.vmem [shape: f32[4,1], index: 7, kind: input, shape index: {}]
  %s8 = inlined_call_operand.vmem [shape: f32[9,256], index: 8, kind: input, shape index: {}]
  %s9 = inlined_call_operand.hbm [shape: f32[2,8,4,256], index: 9, kind: output, shape index: {}]
  %s10 = sld [smem:[#allocation0]]
  $region73: #{tpu_custom_call.1} parent=0
    _
  %s12 = ssub.s32 1, %s10
  %s13 = scalar_select 0, %s12, %s10
  $region1: #{tpu_custom_call.1} parent=0
    #allocation3 [shape = 'u8[8192]{0}', space=vmem, size = 0x2000, scoped, tag = 'output window, operand 0']
    #allocation4 [shape = 's32[2]{0}', space=sflag, size = 0x8, scoped, tag = 'scoped memory for tpu_custom_call.1']
    %14 = vsyncpa [#allocation4], 0
    %s15 = scalar_lea.sflag [#allocation4], 1
    %16 = vsyncpa %s15, 0
    loop: start=0, step=1, limit=18
    $region2: #{tpu_custom_call.1} parent=1 // loop_pre_header
      _
    $region3: #{tpu_custom_call.1} parent=1 // loop_header
      %s18 = sphi 0, %s22
      %p19 = scmp.ge.s32.totalorder %s18, 18
      %s25 = sphi 0, %s37
      %s26 = sphi 0, %s33
      %s27 = sphi 0, %s25
      %s28 = sphi 0, %s26
      %s29 = sphi 0, %s27
      %s30 = sphi 0, %s28
      %s42 = sphi 0, %s44
      %s45 = sphi 0, %s42
      %s46 = sphi 0, %s45
      %s62 = sphi 0, %s46
      %s66 = sphi 0, %s66
      %s68 = sphi 0, %s66
      %s69 = sphi 0, %s68
      %s83 = sphi 0, %s69
      %s87 = sphi 0, %s87
      %s89 = sphi 0, %s87
      %s90 = sphi 0, %s89
      %s104 = sphi 0, %s90
      %s108 = sphi 0, %s108
      %s110 = sphi 0, %s108
      %s111 = sphi 0, %s110
      %s125 = sphi 0, %s111
      %s129 = sphi 0, %s129
      %s131 = sphi 0, %s129
      %s132 = sphi 0, %s131
      %s146 = sphi 0, %s132
      %s150 = sphi 0, %s150
      %s152 = sphi 0, %s150
      %s153 = sphi 0, %s152
      %s167 = sphi 0, %s153
      %s171 = sphi 0, %s171
      %s173 = sphi 0, %s171
      %s174 = sphi 0, %s173
      %s188 = sphi 0, %s174
      %s192 = sphi 0, %s192
      %s194 = sphi 0, %s192
      %s195 = sphi 0, %s194
      %s209 = sphi 0, %s195
      %s213 = sphi 0, %s213
      %s215 = sphi 0, %s213
      %s216 = sphi 0, %s215
      %s230 = sphi 0, %s216
      %s238 = sphi 0, %s240
      %s241 = sphi 0, %s238
      %s242 = sphi 0, %s241
      %s258 = sphi 0, %s242
    $region4: #{tpu_custom_call.1} parent=1 // loop_header_branch
      %21 = sbr.rel (%p19) target = $region8
    $region5: #{tpu_custom_call.1} parent=1 // loop_body
      %s23 = ssub.s32 %s18, 1
      %s24 = ssub.s32 %s18, 2
      %s31 = sadd.s32 1, %s26
      %p32 = scmp.ge.s32.totalorder %s31, 8
      %s33 = scalar_select %p32, 0, %s31
      %s34 = sadd.s32 1, %s25
      %s35 = scalar_select %p32, %s34, %s25
      %p36 = scmp.ge.s32.totalorder %s35, 2
      %s37 = scalar_select %p36, 0, %s35
      %s38 = ssub.s32 %s25, %s37
      %s39 = ssub.s32 %s26, %s33
      %s40 = sor.u32 %s38, %s39
      %p41 = scmp.eq.s32.totalorder %s40, 0
      %s43 = sadd.s32 %s42, 1
      %s44 = scalar_select %p41, %s42, %s43
      %p47 = pneg %p41
      %p48 = scmp.eq.s32.totalorder %s18, 15
      %p49 = por %p47, %p48
      %p50 = scmp.ne.s32.totalorder %s42, %s45
      %p51 = scmp.eq.s32.totalorder %s18, 0
      %p52 = por %p50, %p51
      %p53 = scmp.ne.s32.totalorder %s42, %s45
      %p54 = scmp.eq.s32.totalorder %s23, 15
      %p55 = por %p53, %p54
      %p56 = scmp.ne.s32.totalorder %s45, %s46
      %p57 = scmp.eq.s32.totalorder %s23, 0
      %p58 = por %p56, %p57
      %p59 = scmp.ne.s32.totalorder %s45, %s46
      %p60 = scmp.eq.s32.totalorder %s24, 15
      %p61 = por %p59, %p60
      %p63 = scmp.ne.s32.totalorder %s46, %s62
      %p64 = scmp.eq.s32.totalorder %s24, 0
      %p65 = por %p63, %p64
      %s67 = sadd.s32 %s66, 1
      %p70 = scmp.eq.s32.totalorder %s18, 15
      %p71 = scmp.ne.s32.totalorder %s66, %s68
      %p72 = scmp.eq.s32.totalorder %s18, 0
      %p73 = por %p71, %p72
      %p74 = scmp.ne.s32.totalorder %s66, %s68
      %p75 = scmp.eq.s32.totalorder %s23, 15
      %p76 = por %p74, %p75
      %p77 = scmp.ne.s32.totalorder %s68, %s69
      %p78 = scmp.eq.s32.totalorder %s23, 0
      %p79 = por %p77, %p78
      %p80 = scmp.ne.s32.totalorder %s68, %s69
      %p81 = scmp.eq.s32.totalorder %s24, 15
      %p82 = por %p80, %p81
      %p84 = scmp.ne.s32.totalorder %s69, %s83
      %p85 = scmp.eq.s32.totalorder %s24, 0
      %p86 = por %p84, %p85
      %s88 = sadd.s32 %s87, 1
      %p91 = scmp.eq.s32.totalorder %s18, 15
      %p92 = scmp.ne.s32.totalorder %s87, %s89
      %p93 = scmp.eq.s32.totalorder %s18, 0
      %p94 = por %p92, %p93
      %p95 = scmp.ne.s32.totalorder %s87, %s89
      %p96 = scmp.eq.s32.totalorder %s23, 15
      %p97 = por %p95, %p96
      %p98 = scmp.ne.s32.totalorder %s89, %s90
      %p99 = scmp.eq.s32.totalorder %s23, 0
      %p100 = por %p98, %p99
      %p101 = scmp.ne.s32.totalorder %s89, %s90
      %p102 = scmp.eq.s32.totalorder %s24, 15
      %p103 = por %p101, %p102
      %p105 = scmp.ne.s32.totalorder %s90, %s104
      %p106 = scmp.eq.s32.totalorder %s24, 0
      %p107 = por %p105, %p106
      %s109 = sadd.s32 %s108, 1
      %p112 = scmp.eq.s32.totalorder %s18, 15
      %p113 = scmp.ne.s32.totalorder %s108, %s110
      %p114 = scmp.eq.s32.totalorder %s18, 0
      %p115 = por %p113, %p114
      %p116 = scmp.ne.s32.totalorder %s108, %s110
      %p117 = scmp.eq.s32.totalorder %s23, 15
      %p118 = por %p116, %p117
      %p119 = scmp.ne.s32.totalorder %s110, %s111
      %p120 = scmp.eq.s32.totalorder %s23, 0
      %p121 = por %p119, %p120
      %p122 = scmp.ne.s32.totalorder %s110, %s111
      %p123 = scmp.eq.s32.totalorder %s24, 15
      %p124 = por %p122, %p123
      %p126 = scmp.ne.s32.totalorder %s111, %s125
      %p127 = scmp.eq.s32.totalorder %s24, 0
      %p128 = por %p126, %p127
      %s130 = sadd.s32 %s129, 1
      %p133 = scmp.eq.s32.totalorder %s18, 15
      %p134 = scmp.ne.s32.totalorder %s129, %s131
      %p135 = scmp.eq.s32.totalorder %s18, 0
      %p136 = por %p134, %p135
      %p137 = scmp.ne.s32.totalorder %s129, %s131
      %p138 = scmp.eq.s32.totalorder %s23, 15
      %p139 = por %p137, %p138
      %p140 = scmp.ne.s32.totalorder %s131, %s132
      %p141 = scmp.eq.s32.totalorder %s23, 0
      %p142 = por %p140, %p141
      %p143 = scmp.ne.s32.totalorder %s131, %s132
      %p144 = scmp.eq.s32.totalorder %s24, 15
      %p145 = por %p143, %p144
      %p147 = scmp.ne.s32.totalorder %s132, %s146
      %p148 = scmp.eq.s32.totalorder %s24, 0
      %p149 = por %p147, %p148
      %s151 = sadd.s32 %s150, 1
      %p154 = scmp.eq.s32.totalorder %s18, 15
      %p155 = scmp.ne.s32.totalorder %s150, %s152
      %p156 = scmp.eq.s32.totalorder %s18, 0
      %p157 = por %p155, %p156
      %p158 = scmp.ne.s32.totalorder %s150, %s152
      %p159 = scmp.eq.s32.totalorder %s23, 15
      %p160 = por %p158, %p159
      %p161 = scmp.ne.s32.totalorder %s152, %s153
      %p162 = scmp.eq.s32.totalorder %s23, 0
      %p163 = por %p161, %p162
      %p164 = scmp.ne.s32.totalorder %s152, %s153
      %p165 = scmp.eq.s32.totalorder %s24, 15
      %p166 = por %p164, %p165
      %p168 = scmp.ne.s32.totalorder %s153, %s167
      %p169 = scmp.eq.s32.totalorder %s24, 0
      %p170 = por %p168, %p169
      %s172 = sadd.s32 %s171, 1
      %p175 = scmp.eq.s32.totalorder %s18, 15
      %p176 = scmp.ne.s32.totalorder %s171, %s173
      %p177 = scmp.eq.s32.totalorder %s18, 0
      %p178 = por %p176, %p177
      %p179 = scmp.ne.s32.totalorder %s171, %s173
      %p180 = scmp.eq.s32.totalorder %s23, 15
      %p181 = por %p179, %p180
      %p182 = scmp.ne.s32.totalorder %s173, %s174
      %p183 = scmp.eq.s32.totalorder %s23, 0
      %p184 = por %p182, %p183
      %p185 = scmp.ne.s32.totalorder %s173, %s174
      %p186 = scmp.eq.s32.totalorder %s24, 15
      %p187 = por %p185, %p186
      %p189 = scmp.ne.s32.totalorder %s174, %s188
      %p190 = scmp.eq.s32.totalorder %s24, 0
      %p191 = por %p189, %p190
      %s193 = sadd.s32 %s192, 1
      %p196 = scmp.eq.s32.totalorder %s18, 15
      %p197 = scmp.ne.s32.totalorder %s192, %s194
      %p198 = scmp.eq.s32.totalorder %s18, 0
      %p199 = por %p197, %p198
      %p200 = scmp.ne.s32.totalorder %s192, %s194
      %p201 = scmp.eq.s32.totalorder %s23, 15
      %p202 = por %p200, %p201
      %p203 = scmp.ne.s32.totalorder %s194, %s195
      %p204 = scmp.eq.s32.totalorder %s23, 0
      %p205 = por %p203, %p204
      %p206 = scmp.ne.s32.totalorder %s194, %s195
      %p207 = scmp.eq.s32.totalorder %s24, 15
      %p208 = por %p206, %p207
      %p210 = scmp.ne.s32.totalorder %s195, %s209
      %p211 = scmp.eq.s32.totalorder %s24, 0
      %p212 = por %p210, %p211
      %s214 = sadd.s32 %s213, 1
      %p217 = scmp.eq.s32.totalorder %s18, 15
      %p218 = scmp.ne.s32.totalorder %s213, %s215
      %p219 = scmp.eq.s32.totalorder %s18, 0
      %p220 = por %p218, %p219
      %p221 = scmp.ne.s32.totalorder %s213, %s215
      %p222 = scmp.eq.s32.totalorder %s23, 15
      %p223 = por %p221, %p222
      %p224 = scmp.ne.s32.totalorder %s215, %s216
      %p225 = scmp.eq.s32.totalorder %s23, 0
      %p226 = por %p224, %p225
      %p227 = scmp.ne.s32.totalorder %s215, %s216
      %p228 = scmp.eq.s32.totalorder %s24, 15
      %p229 = por %p227, %p228
      %p231 = scmp.ne.s32.totalorder %s216, %s230
      %p232 = scmp.eq.s32.totalorder %s24, 0
      %p233 = por %p231, %p232
      %s234 = ssub.s32 %s25, %s37
      %s235 = ssub.s32 %s26, %s33
      %s236 = sor.u32 %s234, %s235
      %p237 = scmp.eq.s32.totalorder %s236, 0
      %s239 = sadd.s32 %s238, 1
      %s240 = scalar_select %p237, %s238, %s239
      %p243 = pneg %p237
      %p244 = scmp.eq.s32.totalorder %s18, 15
      %p245 = por %p243, %p244
      %p246 = scmp.ne.s32.totalorder %s238, %s241
      %p247 = scmp.eq.s32.totalorder %s18, 0
      %p248 = por %p246, %p247
      %p249 = scmp.ne.s32.totalorder %s238, %s241
      %p250 = scmp.eq.s32.totalorder %s23, 15
      %p251 = por %p249, %p250
      %p252 = scmp.ne.s32.totalorder %s241, %s242
      %p253 = scmp.eq.s32.totalorder %s23, 0
      %p254 = por %p252, %p253
      %p255 = scmp.ne.s32.totalorder %s241, %s242
      %p256 = scmp.eq.s32.totalorder %s24, 15
      %p257 = por %p255, %p256
      %p259 = scmp.ne.s32.totalorder %s242, %s258
      %p260 = scmp.eq.s32.totalorder %s24, 0
      %p261 = por %p259, %p260
      %p262 = scmp.le.s32.totalorder 1, %s18
      %p263 = scmp.lt.s32.totalorder %s18, 17
      %p264 = pnand %p262, %p263
      %p265 = pneg %p264
      // Predicated region
      $region9: #{tpu_custom_call.1} parent=5 // pred_check
        _
      $region10: #{tpu_custom_call.1} parent=5 // pred_check_branch
        %267 = sbr.rel (%p264) target = $region12
      $region11: #{tpu_custom_call.1} parent=5 // pred_region
        %s268 = ssub.s32 %s18, 1
        // Predicated region
        $region13: #{tpu_custom_call.1} parent=11 // pred_check
          %p269 = pneg %p79
        $region14: #{tpu_custom_call.1} parent=11 // pred_check_branch
          %271 = sbr.rel (%p269) target = $region16
        $region15: #{tpu_custom_call.1} parent=11 // pred_region
          _
        $region16: #{tpu_custom_call.1} parent=11 // pred_fallthru
          _
        // Predicated region
        $region17: #{tpu_custom_call.1} parent=11 // pred_check
          %p272 = pneg %p100
        $region18: #{tpu_custom_call.1} parent=11 // pred_check_branch
          %274 = sbr.rel (%p272) target = $region20
        $region19: #{tpu_custom_call.1} parent=11 // pred_region
          _
        $region20: #{tpu_custom_call.1} parent=11 // pred_fallthru
          _
        // Predicated region
        $region21: #{tpu_custom_call.1} parent=11 // pred_check
          %p275 = pneg %p121
        $region22: #{tpu_custom_call.1} parent=11 // pred_check_branch
          %277 = sbr.rel (%p275) target = $region24
        $region23: #{tpu_custom_call.1} parent=11 // pred_region
          _
        $region24: #{tpu_custom_call.1} parent=11 // pred_fallthru
          _
        // Predicated region
        $region25: #{tpu_custom_call.1} parent=11 // pred_check
          %p278 = pneg %p142
        $region26: #{tpu_custom_call.1} parent=11 // pred_check_branch
          %280 = sbr.rel (%p278) target = $region28
        $region27: #{tpu_custom_call.1} parent=11 // pred_region
          _
        $region28: #{tpu_custom_call.1} parent=11 // pred_fallthru
          _
        // Predicated region
        $region29: #{tpu_custom_call.1} parent=11 // pred_check
          %p281 = pneg %p163
        $region30: #{tpu_custom_call.1} parent=11 // pred_check_branch
          %283 = sbr.rel (%p281) target = $region32
        $region31: #{tpu_custom_call.1} parent=11 // pred_region
          _
        $region32: #{tpu_custom_call.1} parent=11 // pred_fallthru
          _
        // Predicated region
        $region33: #{tpu_custom_call.1} parent=11 // pred_check
          %p284 = pneg %p184
        $region34: #{tpu_custom_call.1} parent=11 // pred_check_branch
          %286 = sbr.rel (%p284) target = $region36
        $region35: #{tpu_custom_call.1} parent=11 // pred_region
          _
        $region36: #{tpu_custom_call.1} parent=11 // pred_fallthru
          _
        // Predicated region
        $region37: #{tpu_custom_call.1} parent=11 // pred_check
          %p287 = pneg %p205
        $region38: #{tpu_custom_call.1} parent=11 // pred_check_branch
          %289 = sbr.rel (%p287) target = $region40
        $region39: #{tpu_custom_call.1} parent=11 // pred_region
          _
        $region40: #{tpu_custom_call.1} parent=11 // pred_fallthru
          _
        // Predicated region
        $region41: #{tpu_custom_call.1} parent=11 // pred_check
          %p290 = pneg %p226
        $region42: #{tpu_custom_call.1} parent=11 // pred_check_branch
          %292 = sbr.rel (%p290) target = $region44
        $region43: #{tpu_custom_call.1} parent=11 // pred_region
          _
        $region44: #{tpu_custom_call.1} parent=11 // pred_fallthru
          _
      $region12: #{tpu_custom_call.1} parent=5 // pred_fallthru
        _
      %p293 = scmp.lt.s32.totalorder %s18, 16
      // Predicated region
      $region45: #{tpu_custom_call.1} parent=5 // pred_check
        %p294 = pneg %p293
      $region46: #{tpu_custom_call.1} parent=5 // pred_check_branch
        %296 = sbr.rel (%p294) target = $region48
      $region47: #{tpu_custom_call.1} parent=5 // pred_region
        // Predicated region
        $region49: #{tpu_custom_call.1} parent=47 // pred_check
          %p297 = pneg %p52
        $region50: #{tpu_custom_call.1} parent=47 // pred_check_branch
          %299 = sbr.rel (%p297) target = $region52
        $region51: #{tpu_custom_call.1} parent=47 // pred_region
          %p300 = scmp.lt.s32.totalorder %s25, 1
          %s301 = scalar_select %p300, %s25, 1
          %p302 = scmp.lt.s32.totalorder %s26, 7
          %s303 = scalar_select %p302, %s26, 7
          %s304 = smul.addr %s303, 2
          %s305 = smul.addr %s301, 16
          %s306 = sadd.s32 %s304, %s305
          %s307 = smul.addr %s306, 4
          %s308 = scalar_lea.vmem %s0, %s307
        $region52: #{tpu_custom_call.1} parent=47 // pred_fallthru
          _
      $region48: #{tpu_custom_call.1} parent=5 // pred_fallthru
        _
      %p309 = scmp.le.s32.totalorder 1, %s18
      %p310 = scmp.lt.s32.totalorder %s18, 17
      %p311 = pnand %p309, %p310
      %p312 = pneg %p311
      // Predicated region
      $region53: #{tpu_custom_call.1} parent=5 // pred_check
        _
      $region54: #{tpu_custom_call.1} parent=5 // pred_check_branch
        %314 = sbr.rel (%p311) target = $region56
      $region55: #{tpu_custom_call.1} parent=5 // pred_region
        %s315 = ssub.s32 %s18, 1
        %p316 = scmp.lt.s32.totalorder %s27, 1
        %s317 = scalar_select %p316, %s27, 1
        %p318 = scmp.lt.s32.totalorder %s28, 7
        %s319 = scalar_select %p318, %s28, 7
        %s320 = smul.addr %s319, 2
        %s321 = smul.addr %s317, 16
        %s322 = sadd.s32 %s320, %s321
        %s323 = smul.addr %s322, 4
        %s324 = scalar_lea.vmem %s0, %s323
        %p325 = pneg %p58
        %p326 = pneg %p55
        %p327 = pneg %p79
        %p328 = pneg %p76
        %p329 = pneg %p100
        %p330 = pneg %p97
        %p331 = pneg %p121
        %p332 = pneg %p118
        %p333 = pneg %p142
        %p334 = pneg %p139
        %p335 = pneg %p163
        %p336 = pneg %p160
        %p337 = pneg %p184
        %p338 = pneg %p181
        %p339 = pneg %p205
        %p340 = pneg %p202
        %p341 = pneg %p226
        %p342 = pneg %p223
        %p343 = pneg %p254
        %p344 = pneg %p251
        %s345 = sand.u32 %s241, 1
        %s346 = scalar_lea.sflag [#allocation4], %s345
        %s347 = sand.u32 %s241, 1
        %s348 = smul.addr %s347, 8
        %s349 = scalar_lea.vmem [#allocation3], %s348
        %p350 = scmp.lt.s32.totalorder %s27, 1
        %s351 = scalar_select %p350, %s27, 1
        %p352 = scmp.lt.s32.totalorder %s28, 7
        %s353 = scalar_select %p352, %s28, 7
        %s354 = smul.addr %s353, 2
        %s355 = smul.addr %s351, 16
        %s356 = sadd.s32 %s354, %s355
        %s357 = smul.addr %s356, 4
        %s358 = scalar_lea.vmem %s0, %s357
        %p360 = scmp.eq.s32.totalorder %s28, 0
        // Predicated region
        $region57: #{tpu_custom_call.1} parent=55 // pred_check
          %p361 = pneg %p360
        $region58: #{tpu_custom_call.1} parent=55 // pred_check_branch
          %363 = sbr.rel (%p361) target = $region60
        $region59: #{tpu_custom_call.1} parent=55 // pred_region
          %364 = vst [vmem:[#allocation2] sm:$0xff] 0.0
        $region60: #{tpu_custom_call.1} parent=55 // pred_fallthru
          _
        %v365 = vld [vmem:[%s358] sm:$0xff]
        %v366 = vld [vmem:[#allocation2] sm:$0xff]
        %v367 = vld [vmem:[%s1] sm:$0xf]
        %v368 = vld [vmem:[%s1 + $0x4] sm:$0xf]
        %v369 = vld [vmem:[%s1 + $0x8] sm:$0xf]
        %v370 = vld [vmem:[%s1 + $0xc] sm:$0xf]
        %v372 = vcombine.high %v365, %v365
        %v374 = vpack.c.bf16 %v365, %v365
        %v375 = vpack.c.bf16 %v372, %v372
        %v376 = vld [vmem:[%s2] sm:$0xf]
        %v377 = vld [vmem:[%s2 + $0x4] sm:$0xf]
        %v378 = vld [vmem:[%s2 + $0x8] sm:$0xf]
        %v379 = vld [vmem:[%s2 + $0xc] sm:$0xf]
        %v381 = vcombine.high %v366, %v366
        %v383 = vpack.c.bf16 %v366, %v366
        %v384 = vpack.c.bf16 %v381, %v381
        %v389 = vunpack.c.l.b16 %v376
        %v390 = vunpack.c.l.b16 %v377
        %v391 = vunpack.c.l.b16 %v378
        %v392 = vunpack.c.l.b16 %v379
        %v393 = vpack.c.b16 %v390, %v389
        %v394 = vpack.c.b16 %v392, %v391
        %vm395 = vcmask 31744
        %v397 = vsel %vm395, %v393, 0
        %v400 = vsel %vm395, %v394, 0
        %vm402 = vcmask 1041408
        %v404 = vsel %vm402, %v383, 0
        %v407 = vsel %vm402, %v384, 0
        %409 = vmatprep.subr.bf16.mxu0 %v407
        %410 = vmatpush1.bf16.msra.mxu0 %v404
        %411 = vmatprep.subr.bf16.mxu0 0
        %412 = vmatpush1.bf16.msra.mxu0 0
        %413 = vmatprep.subr.bf16.mxu0 0
        %414 = vmatpush1.bf16.msra.mxu0 0
        %415 = vmatprep.subr.bf16.mxu0 0
        %416 = vmatpush1.bf16.msra.mxu0 0
        %417 = vmatprep.subr.bf16.mxu0 0
        %418 = vmatpush1.bf16.msra.mxu0 0
        %419 = vmatprep.subr.bf16.mxu0 0
        %420 = vmatpush1.bf16.msra.mxu0 0
        %421 = vmatprep.subr.bf16.mxu0 0
        %422 = vmatpush1.bf16.msra.mxu0 0
        %423 = vmatprep.subr.bf16.mxu0 0
        %424 = vmatpush1.bf16.msra.mxu0 0
        %425 = vmatprep.subr.bf16.mxu0 0
        %426 = vmatpush1.bf16.msra.mxu0 0
        %427 = vmatprep.subr.bf16.mxu0 0
        %428 = vmatpush1.bf16.msra.mxu0 0
        %429 = vmatprep.subr.bf16.mxu0 0
        %430 = vmatpush1.bf16.msra.mxu0 0
        %431 = vmatprep.subr.bf16.mxu0 0
        %432 = vmatpush1.bf16.msra.mxu0 0
        %433 = vmatprep.subr.bf16.mxu0 0
        %434 = vmatpush1.bf16.msra.mxu0 0
        %435 = vmatprep.subr.bf16.mxu0 0
        %436 = vmatpush1.bf16.msra.mxu0 0
        %437 = vmatprep.subr.bf16.mxu0 0
        %438 = vmatpush1.bf16.msra.mxu0 0
        %439 = vmatprep.subr.bf16.mxu0 0
        %440 = vmatpush1.bf16.msra.mxu0 0
        %441 = vmatprep.mubr.bf16.mxu0 0
        %442 = vmatmul.mubr.bf16.gmra.mrb[0].mxu0 %v397
        %v443 = vpop.f32.mrb[0].mxu0
        %v444 = vadd.f32 0.0, %v443
        %v445 = vpop.f32.mrb[0].mxu0
        %v446 = vadd.f32 0.0, %v445
        %v447 = vpop.f32.mrb[0].mxu0
        %v448 = vadd.f32 0.0, %v447
        %v449 = vpop.f32.mrb[0].mxu0
        %v450 = vadd.f32 0.0, %v449
        %451 = vmatprep.mubr.bf16.mxu0 0
        %452 = vmatmul.mubr.bf16.gmra.mrb[0].mxu0 %v400
        %v453 = vpop.f32.mrb[0].mxu0
        %v454 = vadd.f32 0.0, %v453
        %v455 = vpop.f32.mrb[0].mxu0
        %v456 = vadd.f32 0.0, %v455
        %v457 = vpop.f32.mrb[0].mxu0
        %v458 = vadd.f32 0.0, %v457
        %v459 = vpop.f32.mrb[0].mxu0
        %v460 = vadd.f32 0.0, %v459
        %461 = vdwg.mxu0
        %v466 = vunpack.c.l.b16 %v367
        %v467 = vunpack.c.l.b16 %v368
        %v468 = vunpack.c.l.b16 %v369
        %v469 = vunpack.c.l.b16 %v370
        %v470 = vpack.c.b16 %v467, %v466
        %v471 = vpack.c.b16 %v469, %v468
        %v473 = vsel %vm395, %v470, 0
        %v476 = vsel %vm395, %v471, 0
        %v479 = vsel %vm402, %v374, 0
        %v482 = vsel %vm402, %v375, 0
        %484 = vmatprep.subr.bf16.mxu0 %v482
        %485 = vmatpush1.bf16.msra.mxu0 %v479
        %486 = vmatprep.subr.bf16.mxu0 0
        %487 = vmatpush1.bf16.msra.mxu0 0
        %488 = vmatprep.subr.bf16.mxu0 0
        %489 = vmatpush1.bf16.msra.mxu0 0
        %490 = vmatprep.subr.bf16.mxu0 0
        %491 = vmatpush1.bf16.msra.mxu0 0
        %492 = vmatprep.subr.bf16.mxu0 0
        %493 = vmatpush1.bf16.msra.mxu0 0
        %494 = vmatprep.subr.bf16.mxu0 0
        %495 = vmatpush1.bf16.msra.mxu0 0
        %496 = vmatprep.subr.bf16.mxu0 0
        %497 = vmatpush1.bf16.msra.mxu0 0
        %498 = vmatprep.subr.bf16.mxu0 0
        %499 = vmatpush1.bf16.msra.mxu0 0
        %500 = vmatprep.subr.bf16.mxu0 0
        %501 = vmatpush1.bf16.msra.mxu0 0
        %502 = vmatprep.subr.bf16.mxu0 0
        %503 = vmatpush1.bf16.msra.mxu0 0
        %504 = vmatprep.subr.bf16.mxu0 0
        %505 = vmatpush1.bf16.msra.mxu0 0
        %506 = vmatprep.subr.bf16.mxu0 0
        %507 = vmatpush1.bf16.msra.mxu0 0
        %508 = vmatprep.subr.bf16.mxu0 0
        %509 = vmatpush1.bf16.msra.mxu0 0
        %510 = vmatprep.subr.bf16.mxu0 0
        %511 = vmatpush1.bf16.msra.mxu0 0
        %512 = vmatprep.subr.bf16.mxu0 0
        %513 = vmatpush1.bf16.msra.mxu0 0
        %514 = vmatprep.subr.bf16.mxu0 0
        %515 = vmatpush1.bf16.msra.mxu0 0
        %516 = vmatprep.mubr.bf16.mxu0 0
        %517 = vmatmul.mubr.bf16.gmra.mrb[0].mxu0 %v473
        %v518 = vpop.f32.mrb[0].mxu0
        %v519 = vadd.f32 %v444, %v518
        %v520 = vpop.f32.mrb[0].mxu0
        %v521 = vadd.f32 %v446, %v520
        %v522 = vpop.f32.mrb[0].mxu0
        %v523 = vadd.f32 %v448, %v522
        %v524 = vpop.f32.mrb[0].mxu0
        %v525 = vadd.f32 %v450, %v524
        %526 = vmatprep.mubr.bf16.mxu0 0
        %527 = vmatmul.mubr.bf16.gmra.mrb[0].mxu0 %v476
        %v528 = vpop.f32.mrb[0].mxu0
        %v529 = vadd.f32 %v454, %v528
        %v530 = vpop.f32.mrb[0].mxu0
        %v531 = vadd.f32 %v456, %v530
        %v532 = vpop.f32.mrb[0].mxu0
        %v533 = vadd.f32 %v458, %v532
        %v534 = vpop.f32.mrb[0].mxu0
        %v535 = vadd.f32 %v460, %v534
        %536 = vdwg.mxu0
        %v537 = vld [vmem:[%s3] sm:$0xff]
        %v538 = vld [vmem:[%s3 + $0x8] sm:$0xff]
        %v539 = vld [vmem:[%s3 + $0x10] sm:$0xff]
        %v540 = vld [vmem:[%s3 + $0x18] sm:$0xff]
        %542 = vset.pattern.permute.xlu0 0
        %543 = vperm.xlu0 %542, %v537
        %v544 = vpop.permute.xlu0 %543
        %547 = vset.pattern.permute.xlu0 0
        %548 = vperm.xlu0 %547, %v538
        %v549 = vpop.permute.xlu0 %548
        %552 = vset.pattern.permute.xlu0 0
        %553 = vperm.xlu0 %552, %v539
        %v554 = vpop.permute.xlu0 %553
        %557 = vset.pattern.permute.xlu0 0
        %558 = vperm.xlu0 %557, %v540
        %v559 = vpop.permute.xlu0 %558
        %v561 = vadd.f32 %v519, %v544
        %v562 = vadd.f32 %v521, %v544
        %v563 = vadd.f32 %v523, %v549
        %v564 = vadd.f32 %v525, %v549
        %v565 = vadd.f32 %v529, %v554
        %v566 = vadd.f32 %v531, %v554
        %v567 = vadd.f32 %v533, %v559
        %v568 = vadd.f32 %v535, %v559
        %v569 = vmax.f32 %v561, 0.0
        %v570 = vmax.f32 %v562, 0.0
        %v571 = vmax.f32 %v563, 0.0
        %v572 = vmax.f32 %v564, 0.0
        %v573 = vmax.f32 %v565, 0.0
        %v574 = vmax.f32 %v566, 0.0
        %v575 = vmax.f32 %v567, 0.0
        %v576 = vmax.f32 %v568, 0.0
        %v577 = vmin.f32 %v569, 6.0
        %v578 = vmin.f32 %v570, 6.0
        %v579 = vmin.f32 %v571, 6.0
        %v580 = vmin.f32 %v572, 6.0
        %v581 = vmin.f32 %v573, 6.0
        %v582 = vmin.f32 %v574, 6.0
        %v583 = vmin.f32 %v575, 6.0
        %v584 = vmin.f32 %v576, 6.0
        %v585 = vld [vmem:[%s4] sm:$0xff]
        %v586 = vld [vmem:[%s4 + $0x8] sm:$0xff]
        %v587 = vld [vmem:[%s4 + $0x10] sm:$0xff]
        %v588 = vld [vmem:[%s4 + $0x18] sm:$0xff]
        %v589 = vld [vmem:[%s8] sm:$0xff]
        %v590 = vld [vmem:[%s8 + $0x8] sm:$0xff]
        %v591 = vld [vmem:[%s8 + $0x10] sm:$0x1]
        %v592 = vld [vmem:[%s8 + $0x18] sm:$0x1]
        %593 = vrot.lane.b32.xlu0 %v577, 17
        %v594 = vpop.permute.xlu0 %593
        %595 = vrot.lane.b32.xlu0 %v579, 17
        %v596 = vpop.permute.xlu0 %595
        %597 = vrot.lane.b32.xlu0 %v581, 17
        %v598 = vpop.permute.xlu0 %597
        %599 = vrot.lane.b32.xlu0 %v583, 17
        %v600 = vpop.permute.xlu0 %599
        %601 = vrot.lane.b32.xlu0 %v578, 17
        %v602 = vpop.permute.xlu0 %601
        %603 = vrot.lane.b32.xlu0 %v580, 17
        %v604 = vpop.permute.xlu0 %603
        %605 = vrot.lane.b32.xlu0 %v582, 17
        %v606 = vpop.permute.xlu0 %605
        %607 = vrot.lane.b32.xlu0 %v584, 17
        %v608 = vpop.permute.xlu0 %607
        %v609 = vlaneseq
        %v610 = vand.u32 %v609, 127
        %vm611 = vcmp.lt.s32.totalorder %v610, 17
        %v612 = vsel %vm611, %v594, %v602
        %v613 = vsel %vm611, %v596, %v604
        %v614 = vsel %vm611, %v598, %v606
        %v615 = vsel %vm611, %v600, %v608
        %v616 = vsel %vm611, %v602, %v594
        %v617 = vsel %vm611, %v604, %v596
        %v618 = vsel %vm611, %v606, %v598
        %v619 = vsel %vm611, %v608, %v600
        %v620 = vlaneseq
        %v621 = vshrl.u32 %v620, 7
        %v622 = vsub.s32 0, %v621
        %v623 = vrot.slane %v589, %v622
        %v624 = vlaneseq
        %v625 = vshrl.u32 %v624, 7
        %v626 = vsub.s32 0, %v625
        %v627 = vrot.slane %v590, %v626
        %v628 = vmul.f32 %v616, %v623
        %v629 = vmul.f32 %v612, %v627
        %v630 = vmul.f32 %v617, %v623
        %v631 = vmul.f32 %v613, %v627
        %v632 = vmul.f32 %v618, %v623
        %v633 = vmul.f32 %v614, %v627
        %v634 = vmul.f32 %v619, %v623
        %v635 = vmul.f32 %v615, %v627
        %637 = vset.pattern.permute.xlu0 0
        %638 = vperm.xlu0 %637, %v585
        %v639 = vpop.permute.xlu0 %638
        %642 = vset.pattern.permute.xlu0 0
        %643 = vperm.xlu0 %642, %v586
        %v644 = vpop.permute.xlu0 %643
        %647 = vset.pattern.permute.xlu0 0
        %648 = vperm.xlu0 %647, %v587
        %v649 = vpop.permute.xlu0 %648
        %652 = vset.pattern.permute.xlu0 0
        %653 = vperm.xlu0 %652, %v588
        %v654 = vpop.permute.xlu0 %653
        %v656 = vmul.f32 %v628, %v639
        %v657 = vmul.f32 %v629, %v639
        %v658 = vmul.f32 %v630, %v644
        %v659 = vmul.f32 %v631, %v644
        %v660 = vmul.f32 %v632, %v649
        %v661 = vmul.f32 %v633, %v649
        %v662 = vmul.f32 %v634, %v654
        %v663 = vmul.f32 %v635, %v654
        %v664 = vadd.f32 %v656, 0.0
        %v665 = vadd.f32 %v657, 0.0
        %v666 = vadd.f32 %v658, 0.0
        %v667 = vadd.f32 %v659, 0.0
        %v668 = vadd.f32 %v660, 0.0
        %v669 = vadd.f32 %v661, 0.0
        %v670 = vadd.f32 %v662, 0.0
        %v671 = vadd.f32 %v663, 0.0
        %672 = vrot.lane.b32.xlu0 %v577, 16
        %v673 = vpop.permute.xlu0 %672
        %674 = vrot.lane.b32.xlu0 %v579, 16
        %v675 = vpop.permute.xlu0 %674
        %676 = vrot.lane.b32.xlu0 %v581, 16
        %v677 = vpop.permute.xlu0 %676
        %678 = vrot.lane.b32.xlu0 %v583, 16
        %v679 = vpop.permute.xlu0 %678
        %680 = vrot.lane.b32.xlu0 %v578, 16
        %v681 = vpop.permute.xlu0 %680
        %682 = vrot.lane.b32.xlu0 %v580, 16
        %v683 = vpop.permute.xlu0 %682
        %684 = vrot.lane.b32.xlu0 %v582, 16
        %v685 = vpop.permute.xlu0 %684
        %686 = vrot.lane.b32.xlu0 %v584, 16
        %v687 = vpop.permute.xlu0 %686
        %vm688 = vcmp.lt.s32.totalorder %v610, 16
        %v689 = vsel %vm688, %v673, %v681
        %v690 = vsel %vm688, %v675, %v683
        %v691 = vsel %vm688, %v677, %v685
        %v692 = vsel %vm688, %v679, %v687
        %v693 = vsel %vm688, %v681, %v673
        %v694 = vsel %vm688, %v683, %v675
        %v695 = vsel %vm688, %v685, %v677
        %v696 = vsel %vm688, %v687, %v679
        %v697 = vlaneseq
        %v698 = vshrl.u32 %v697, 7
        %v699 = vsub.s32 1, %v698
        %v700 = vrot.slane %v589, %v699
        %v701 = vlaneseq
        %v702 = vshrl.u32 %v701, 7
        %v703 = vsub.s32 1, %v702
        %v704 = vrot.slane %v590, %v703
        %v705 = vmul.f32 %v693, %v700
        %v706 = vmul.f32 %v689, %v704
        %v707 = vmul.f32 %v694, %v700
        %v708 = vmul.f32 %v690, %v704
        %v709 = vmul.f32 %v695, %v700
        %v710 = vmul.f32 %v691, %v704
        %v711 = vmul.f32 %v696, %v700
        %v712 = vmul.f32 %v692, %v704
        %713 = vset.pattern.permute.xlu0 1
        %714 = vperm.xlu0 %713, %v585
        %v715 = vpop.permute.xlu0 %714
        %717 = vset.pattern.permute.xlu0 1
        %718 = vperm.xlu0 %717, %v586
        %v719 = vpop.permute.xlu0 %718
        %721 = vset.pattern.permute.xlu0 1
        %722 = vperm.xlu0 %721, %v587
        %v723 = vpop.permute.xlu0 %722
        %725 = vset.pattern.permute.xlu0 1
        %726 = vperm.xlu0 %725, %v588
        %v727 = vpop.permute.xlu0 %726
        %v729 = vmul.f32 %v705, %v715
        %v730 = vmul.f32 %v706, %v715
        %v731 = vmul.f32 %v707, %v719
        %v732 = vmul.f32 %v708, %v719
        %v733 = vmul.f32 %v709, %v723
        %v734 = vmul.f32 %v710, %v723
        %v735 = vmul.f32 %v711, %v727
        %v736 = vmul.f32 %v712, %v727
        %v737 = vadd.f32 %v664, %v729
        %v738 = vadd.f32 %v665, %v730
        %v739 = vadd.f32 %v666, %v731
        %v740 = vadd.f32 %v667, %v732
        %v741 = vadd.f32 %v668, %v733
        %v742 = vadd.f32 %v669, %v734
        %v743 = vadd.f32 %v670, %v735
        %v744 = vadd.f32 %v671, %v736
        %745 = vrot.lane.b32.xlu0 %v577, 15
        %v746 = vpop.permute.xlu0 %745
        %747 = vrot.lane.b32.xlu0 %v579, 15
        %v748 = vpop.permute.xlu0 %747
        %749 = vrot.lane.b32.xlu0 %v581, 15
        %v750 = vpop.permute.xlu0 %749
        %751 = vrot.lane.b32.xlu0 %v583, 15
        %v752 = vpop.permute.xlu0 %751
        %753 = vrot.lane.b32.xlu0 %v578, 15
        %v754 = vpop.permute.xlu0 %753
        %755 = vrot.lane.b32.xlu0 %v580, 15
        %v756 = vpop.permute.xlu0 %755
        %757 = vrot.lane.b32.xlu0 %v582, 15
        %v758 = vpop.permute.xlu0 %757
        %759 = vrot.lane.b32.xlu0 %v584, 15
        %v760 = vpop.permute.xlu0 %759
        %vm761 = vcmp.lt.s32.totalorder %v610, 15
        %v762 = vsel %vm761, %v746, %v754
        %v763 = vsel %vm761, %v748, %v756
        %v764 = vsel %vm761, %v750, %v758
        %v765 = vsel %vm761, %v752, %v760
        %v766 = vsel %vm761, %v754, %v746
        %v767 = vsel %vm761, %v756, %v748
        %v768 = vsel %vm761, %v758, %v750
        %v769 = vsel %vm761, %v760, %v752
        %v770 = vlaneseq
        %v771 = vshrl.u32 %v770, 7
        %v772 = vsub.s32 2, %v771
        %v773 = vrot.slane %v589, %v772
        %v774 = vlaneseq
        %v775 = vshrl.u32 %v774, 7
        %v776 = vsub.s32 2, %v775
        %v777 = vrot.slane %v590, %v776
        %v778 = vmul.f32 %v766, %v773
        %v779 = vmul.f32 %v762, %v777
        %v780 = vmul.f32 %v767, %v773
        %v781 = vmul.f32 %v763, %v777
        %v782 = vmul.f32 %v768, %v773
        %v783 = vmul.f32 %v764, %v777
        %v784 = vmul.f32 %v769, %v773
        %v785 = vmul.f32 %v765, %v777
        %786 = vset.pattern.permute.xlu0 2
        %787 = vperm.xlu0 %786, %v585
        %v788 = vpop.permute.xlu0 %787
        %790 = vset.pattern.permute.xlu0 2
        %791 = vperm.xlu0 %790, %v586
        %v792 = vpop.permute.xlu0 %791
        %794 = vset.pattern.permute.xlu0 2
        %795 = vperm.xlu0 %794, %v587
        %v796 = vpop.permute.xlu0 %795
        %798 = vset.pattern.permute.xlu0 2
        %799 = vperm.xlu0 %798, %v588
        %v800 = vpop.permute.xlu0 %799
        %v802 = vmul.f32 %v778, %v788
        %v803 = vmul.f32 %v779, %v788
        %v804 = vmul.f32 %v780, %v792
        %v805 = vmul.f32 %v781, %v792
        %v806 = vmul.f32 %v782, %v796
        %v807 = vmul.f32 %v783, %v796
        %v808 = vmul.f32 %v784, %v800
        %v809 = vmul.f32 %v785, %v800
        %v810 = vadd.f32 %v737, %v802
        %v811 = vadd.f32 %v738, %v803
        %v812 = vadd.f32 %v739, %v804
        %v813 = vadd.f32 %v740, %v805
        %v814 = vadd.f32 %v741, %v806
        %v815 = vadd.f32 %v742, %v807
        %v816 = vadd.f32 %v743, %v808
        %v817 = vadd.f32 %v744, %v809
        %818 = vrot.lane.b32.xlu0 %v577, 1
        %v819 = vpop.permute.xlu0 %818
        %820 = vrot.lane.b32.xlu0 %v579, 1
        %v821 = vpop.permute.xlu0 %820
        %822 = vrot.lane.b32.xlu0 %v581, 1
        %v823 = vpop.permute.xlu0 %822
        %824 = vrot.lane.b32.xlu0 %v583, 1
        %v825 = vpop.permute.xlu0 %824
        %826 = vrot.lane.b32.xlu0 %v578, 1
        %v827 = vpop.permute.xlu0 %826
        %828 = vrot.lane.b32.xlu0 %v580, 1
        %v829 = vpop.permute.xlu0 %828
        %830 = vrot.lane.b32.xlu0 %v582, 1
        %v831 = vpop.permute.xlu0 %830
        %832 = vrot.lane.b32.xlu0 %v584, 1
        %v833 = vpop.permute.xlu0 %832
        %vm834 = vcmp.lt.s32.totalorder %v610, 1
        %v835 = vsel %vm834, %v819, %v827
        %v836 = vsel %vm834, %v821, %v829
        %v837 = vsel %vm834, %v823, %v831
        %v838 = vsel %vm834, %v825, %v833
        %v839 = vsel %vm834, %v827, %v819
        %v840 = vsel %vm834, %v829, %v821
        %v841 = vsel %vm834, %v831, %v823
        %v842 = vsel %vm834, %v833, %v825
        %v843 = vlaneseq
        %v844 = vshrl.u32 %v843, 7
        %v845 = vsub.s32 3, %v844
        %v846 = vrot.slane %v589, %v845
        %v847 = vlaneseq
        %v848 = vshrl.u32 %v847, 7
        %v849 = vsub.s32 3, %v848
        %v850 = vrot.slane %v590, %v849
        %v851 = vmul.f32 %v839, %v846
        %v852 = vmul.f32 %v835, %v850
        %v853 = vmul.f32 %v840, %v846
        %v854 = vmul.f32 %v836, %v850
        %v855 = vmul.f32 %v841, %v846
        %v856 = vmul.f32 %v837, %v850
        %v857 = vmul.f32 %v842, %v846
        %v858 = vmul.f32 %v838, %v850
        %859 = vset.pattern.permute.xlu0 3
        %860 = vperm.xlu0 %859, %v585
        %v861 = vpop.permute.xlu0 %860
        %863 = vset.pattern.permute.xlu0 3
        %864 = vperm.xlu0 %863, %v586
        %v865 = vpop.permute.xlu0 %864
        %867 = vset.pattern.permute.xlu0 3
        %868 = vperm.xlu0 %867, %v587
        %v869 = vpop.permute.xlu0 %868
        %871 = vset.pattern.permute.xlu0 3
        %872 = vperm.xlu0 %871, %v588
        %v873 = vpop.permute.xlu0 %872
        %v875 = vmul.f32 %v851, %v861
        %v876 = vmul.f32 %v852, %v861
        %v877 = vmul.f32 %v853, %v865
        %v878 = vmul.f32 %v854, %v865
        %v879 = vmul.f32 %v855, %v869
        %v880 = vmul.f32 %v856, %v869
        %v881 = vmul.f32 %v857, %v873
        %v882 = vmul.f32 %v858, %v873
        %v883 = vadd.f32 %v810, %v875
        %v884 = vadd.f32 %v811, %v876
        %v885 = vadd.f32 %v812, %v877
        %v886 = vadd.f32 %v813, %v878
        %v887 = vadd.f32 %v814, %v879
        %v888 = vadd.f32 %v815, %v880
        %v889 = vadd.f32 %v816, %v881
        %v890 = vadd.f32 %v817, %v882
        %891 = vset.pattern.permute.xlu0 4
        %892 = vperm.xlu0 %891, %v585
        %v893 = vpop.permute.xlu0 %892
        %895 = vset.pattern.permute.xlu0 4
        %896 = vperm.xlu0 %895, %v586
        %v897 = vpop.permute.xlu0 %896
        %899 = vset.pattern.permute.xlu0 4
        %900 = vperm.xlu0 %899, %v587
        %v901 = vpop.permute.xlu0 %900
        %903 = vset.pattern.permute.xlu0 4
        %904 = vperm.xlu0 %903, %v588
        %v905 = vpop.permute.xlu0 %904
        %v907 = vmul.f32 %v577, %v893
        %v908 = vmul.f32 %v578, %v893
        %v909 = vmul.f32 %v579, %v897
        %v910 = vmul.f32 %v580, %v897
        %v911 = vmul.f32 %v581, %v901
        %v912 = vmul.f32 %v582, %v901
        %v913 = vmul.f32 %v583, %v905
        %v914 = vmul.f32 %v584, %v905
        %v915 = vadd.f32 %v883, %v907
        %v916 = vadd.f32 %v884, %v908
        %v917 = vadd.f32 %v885, %v909
        %v918 = vadd.f32 %v886, %v910
        %v919 = vadd.f32 %v887, %v911
        %v920 = vadd.f32 %v888, %v912
        %v921 = vadd.f32 %v889, %v913
        %v922 = vadd.f32 %v890, %v914
        %923 = vrot.lane.b32.xlu0 %v577, 127
        %v924 = vpop.permute.xlu0 %923
        %925 = vrot.lane.b32.xlu0 %v579, 127
        %v926 = vpop.permute.xlu0 %925
        %927 = vrot.lane.b32.xlu0 %v581, 127
        %v928 = vpop.permute.xlu0 %927
        %929 = vrot.lane.b32.xlu0 %v583, 127
        %v930 = vpop.permute.xlu0 %929
        %931 = vrot.lane.b32.xlu0 %v578, 127
        %v932 = vpop.permute.xlu0 %931
        %933 = vrot.lane.b32.xlu0 %v580, 127
        %v934 = vpop.permute.xlu0 %933
        %935 = vrot.lane.b32.xlu0 %v582, 127
        %v936 = vpop.permute.xlu0 %935
        %937 = vrot.lane.b32.xlu0 %v584, 127
        %v938 = vpop.permute.xlu0 %937
        %vm939 = vcmp.lt.s32.totalorder %v610, 127
        %v940 = vsel %vm939, %v924, %v932
        %v941 = vsel %vm939, %v926, %v934
        %v942 = vsel %vm939, %v928, %v936
        %v943 = vsel %vm939, %v930, %v938
        %v944 = vsel %vm939, %v932, %v924
        %v945 = vsel %vm939, %v934, %v926
        %v946 = vsel %vm939, %v936, %v928
        %v947 = vsel %vm939, %v938, %v930
        %v948 = vlaneseq
        %v949 = vshrl.u32 %v948, 7
        %v950 = vsub.s32 5, %v949
        %v951 = vrot.slane %v589, %v950
        %v952 = vlaneseq
        %v953 = vshrl.u32 %v952, 7
        %v954 = vsub.s32 5, %v953
        %v955 = vrot.slane %v590, %v954
        %v956 = vmul.f32 %v940, %v951
        %v957 = vmul.f32 %v944, %v955
        %v958 = vmul.f32 %v941, %v951
        %v959 = vmul.f32 %v945, %v955
        %v960 = vmul.f32 %v942, %v951
        %v961 = vmul.f32 %v946, %v955
        %v962 = vmul.f32 %v943, %v951
        %v963 = vmul.f32 %v947, %v955
        %964 = vset.pattern.permute.xlu0 5
        %965 = vperm.xlu0 %964, %v585
        %v966 = vpop.permute.xlu0 %965
        %968 = vset.pattern.permute.xlu0 5
        %969 = vperm.xlu0 %968, %v586
        %v970 = vpop.permute.xlu0 %969
        %972 = vset.pattern.permute.xlu0 5
        %973 = vperm.xlu0 %972, %v587
        %v974 = vpop.permute.xlu0 %973
        %976 = vset.pattern.permute.xlu0 5
        %977 = vperm.xlu0 %976, %v588
        %v978 = vpop.permute.xlu0 %977
        %v980 = vmul.f32 %v956, %v966
        %v981 = vmul.f32 %v957, %v966
        %v982 = vmul.f32 %v958, %v970
        %v983 = vmul.f32 %v959, %v970
        %v984 = vmul.f32 %v960, %v974
        %v985 = vmul.f32 %v961, %v974
        %v986 = vmul.f32 %v962, %v978
        %v987 = vmul.f32 %v963, %v978
        %v988 = vadd.f32 %v915, %v980
        %v989 = vadd.f32 %v916, %v981
        %v990 = vadd.f32 %v917, %v982
        %v991 = vadd.f32 %v918, %v983
        %v992 = vadd.f32 %v919, %v984
        %v993 = vadd.f32 %v920, %v985
        %v994 = vadd.f32 %v921, %v986
        %v995 = vadd.f32 %v922, %v987
        %996 = vrot.lane.b32.xlu0 %v577, 113
        %v997 = vpop.permute.xlu0 %996
        %998 = vrot.lane.b32.xlu0 %v579, 113
        %v999 = vpop.permute.xlu0 %998
        %1000 = vrot.lane.b32.xlu0 %v581, 113
        %v1001 = vpop.permute.xlu0 %1000
        %1002 = vrot.lane.b32.xlu0 %v583, 113
        %v1003 = vpop.permute.xlu0 %1002
        %1004 = vrot.lane.b32.xlu0 %v578, 113
        %v1005 = vpop.permute.xlu0 %1004
        %1006 = vrot.lane.b32.xlu0 %v580, 113
        %v1007 = vpop.permute.xlu0 %1006
        %1008 = vrot.lane.b32.xlu0 %v582, 113
        %v1009 = vpop.permute.xlu0 %1008
        %1010 = vrot.lane.b32.xlu0 %v584, 113
        %v1011 = vpop.permute.xlu0 %1010
        %vm1012 = vcmp.lt.s32.totalorder %v610, 113
        %v1013 = vsel %vm1012, %v997, %v1005
        %v1014 = vsel %vm1012, %v999, %v1007
        %v1015 = vsel %vm1012, %v1001, %v1009
        %v1016 = vsel %vm1012, %v1003, %v1011
        %v1017 = vsel %vm1012, %v1005, %v997
        %v1018 = vsel %vm1012, %v1007, %v999
        %v1019 = vsel %vm1012, %v1009, %v1001
        %v1020 = vsel %vm1012, %v1011, %v1003
        %v1021 = vlaneseq
        %v1022 = vshrl.u32 %v1021, 7
        %v1023 = vsub.s32 6, %v1022
        %v1024 = vrot.slane %v589, %v1023
        %v1025 = vlaneseq
        %v1026 = vshrl.u32 %v1025, 7
        %v1027 = vsub.s32 6, %v1026
        %v1028 = vrot.slane %v590, %v1027
        %v1029 = vmul.f32 %v1013, %v1024
        %v1030 = vmul.f32 %v1017, %v1028
        %v1031 = vmul.f32 %v1014, %v1024
        %v1032 = vmul.f32 %v1018, %v1028
        %v1033 = vmul.f32 %v1015, %v1024
        %v1034 = vmul.f32 %v1019, %v1028
        %v1035 = vmul.f32 %v1016, %v1024
        %v1036 = vmul.f32 %v1020, %v1028
        %1037 = vset.pattern.permute.xlu0 6
        %1038 = vperm.xlu0 %1037, %v585
        %v1039 = vpop.permute.xlu0 %1038
        %1041 = vset.pattern.permute.xlu0 6
        %1042 = vperm.xlu0 %1041, %v586
        %v1043 = vpop.permute.xlu0 %1042
        %1045 = vset.pattern.permute.xlu0 6
        %1046 = vperm.xlu0 %1045, %v587
        %v1047 = vpop.permute.xlu0 %1046
        %1049 = vset.pattern.permute.xlu0 6
        %1050 = vperm.xlu0 %1049, %v588
        %v1051 = vpop.permute.xlu0 %1050
        %v1053 = vmul.f32 %v1029, %v1039
        %v1054 = vmul.f32 %v1030, %v1039
        %v1055 = vmul.f32 %v1031, %v1043
        %v1056 = vmul.f32 %v1032, %v1043
        %v1057 = vmul.f32 %v1033, %v1047
        %v1058 = vmul.f32 %v1034, %v1047
        %v1059 = vmul.f32 %v1035, %v1051
        %v1060 = vmul.f32 %v1036, %v1051
        %v1061 = vadd.f32 %v988, %v1053
        %v1062 = vadd.f32 %v989, %v1054
        %v1063 = vadd.f32 %v990, %v1055
        %v1064 = vadd.f32 %v991, %v1056
        %v1065 = vadd.f32 %v992, %v1057
        %v1066 = vadd.f32 %v993, %v1058
        %v1067 = vadd.f32 %v994, %v1059
        %v1068 = vadd.f32 %v995, %v1060
        %1069 = vrot.lane.b32.xlu0 %v577, 112
        %v1070 = vpop.permute.xlu0 %1069
        %1071 = vrot.lane.b32.xlu0 %v579, 112
        %v1072 = vpop.permute.xlu0 %1071
        %1073 = vrot.lane.b32.xlu0 %v581, 112
        %v1074 = vpop.permute.xlu0 %1073
        %1075 = vrot.lane.b32.xlu0 %v583, 112
        %v1076 = vpop.permute.xlu0 %1075
        %1077 = vrot.lane.b32.xlu0 %v578, 112
        %v1078 = vpop.permute.xlu0 %1077
        %1079 = vrot.lane.b32.xlu0 %v580, 112
        %v1080 = vpop.permute.xlu0 %1079
        %1081 = vrot.lane.b32.xlu0 %v582, 112
        %v1082 = vpop.permute.xlu0 %1081
        %1083 = vrot.lane.b32.xlu0 %v584, 112
        %v1084 = vpop.permute.xlu0 %1083
        %vm1085 = vcmp.lt.s32.totalorder %v610, 112
        %v1086 = vsel %vm1085, %v1070, %v1078
        %v1087 = vsel %vm1085, %v1072, %v1080
        %v1088 = vsel %vm1085, %v1074, %v1082
        %v1089 = vsel %vm1085, %v1076, %v1084
        %v1090 = vsel %vm1085, %v1078, %v1070
        %v1091 = vsel %vm1085, %v1080, %v1072
        %v1092 = vsel %vm1085, %v1082, %v1074
        %v1093 = vsel %vm1085, %v1084, %v1076
        %v1094 = vlaneseq
        %v1095 = vshrl.u32 %v1094, 7
        %v1096 = vsub.s32 7, %v1095
        %v1097 = vrot.slane %v589, %v1096
        %v1098 = vlaneseq
        %v1099 = vshrl.u32 %v1098, 7
        %v1100 = vsub.s32 7, %v1099
        %v1101 = vrot.slane %v590, %v1100
        %v1102 = vmul.f32 %v1086, %v1097
        %v1103 = vmul.f32 %v1090, %v1101
        %v1104 = vmul.f32 %v1087, %v1097
        %v1105 = vmul.f32 %v1091, %v1101
        %v1106 = vmul.f32 %v1088, %v1097
        %v1107 = vmul.f32 %v1092, %v1101
        %v1108 = vmul.f32 %v1089, %v1097
        %v1109 = vmul.f32 %v1093, %v1101
        %1110 = vset.pattern.permute.xlu0 7
        %1111 = vperm.xlu0 %1110, %v585
        %v1112 = vpop.permute.xlu0 %1111
        %1114 = vset.pattern.permute.xlu0 7
        %1115 = vperm.xlu0 %1114, %v586
        %v1116 = vpop.permute.xlu0 %1115
        %1118 = vset.pattern.permute.xlu0 7
        %1119 = vperm.xlu0 %1118, %v587
        %v1120 = vpop.permute.xlu0 %1119
        %1122 = vset.pattern.permute.xlu0 7
        %1123 = vperm.xlu0 %1122, %v588
        %v1124 = vpop.permute.xlu0 %1123
        %v1126 = vmul.f32 %v1102, %v1112
        %v1127 = vmul.f32 %v1103, %v1112
        %v1128 = vmul.f32 %v1104, %v1116
        %v1129 = vmul.f32 %v1105, %v1116
        %v1130 = vmul.f32 %v1106, %v1120
        %v1131 = vmul.f32 %v1107, %v1120
        %v1132 = vmul.f32 %v1108, %v1124
        %v1133 = vmul.f32 %v1109, %v1124
        %v1134 = vadd.f32 %v1061, %v1126
        %v1135 = vadd.f32 %v1062, %v1127
        %v1136 = vadd.f32 %v1063, %v1128
        %v1137 = vadd.f32 %v1064, %v1129
        %v1138 = vadd.f32 %v1065, %v1130
        %v1139 = vadd.f32 %v1066, %v1131
        %v1140 = vadd.f32 %v1067, %v1132
        %v1141 = vadd.f32 %v1068, %v1133
        %1142 = vrot.lane.b32.xlu0 %v577, 111
        %v1143 = vpop.permute.xlu0 %1142
        %1144 = vrot.lane.b32.xlu0 %v579, 111
        %v1145 = vpop.permute.xlu0 %1144
        %1146 = vrot.lane.b32.xlu0 %v581, 111
        %v1147 = vpop.permute.xlu0 %1146
        %1148 = vrot.lane.b32.xlu0 %v583, 111
        %v1149 = vpop.permute.xlu0 %1148
        %1150 = vrot.lane.b32.xlu0 %v578, 111
        %v1151 = vpop.permute.xlu0 %1150
        %1152 = vrot.lane.b32.xlu0 %v580, 111
        %v1153 = vpop.permute.xlu0 %1152
        %1154 = vrot.lane.b32.xlu0 %v582, 111
        %v1155 = vpop.permute.xlu0 %1154
        %1156 = vrot.lane.b32.xlu0 %v584, 111
        %v1157 = vpop.permute.xlu0 %1156
        %vm1158 = vcmp.lt.s32.totalorder %v610, 111
        %v1159 = vsel %vm1158, %v1143, %v1151
        %v1160 = vsel %vm1158, %v1145, %v1153
        %v1161 = vsel %vm1158, %v1147, %v1155
        %v1162 = vsel %vm1158, %v1149, %v1157
        %v1163 = vsel %vm1158, %v1151, %v1143
        %v1164 = vsel %vm1158, %v1153, %v1145
        %v1165 = vsel %vm1158, %v1155, %v1147
        %v1166 = vsel %vm1158, %v1157, %v1149
        %v1167 = vlaneseq
        %v1168 = vshrl.u32 %v1167, 7
        %v1169 = vsub.s32 0, %v1168
        %v1170 = vrot.slane %v591, %v1169
        %v1171 = vlaneseq
        %v1172 = vshrl.u32 %v1171, 7
        %v1173 = vsub.s32 0, %v1172
        %v1174 = vrot.slane %v592, %v1173
        %v1175 = vmul.f32 %v1159, %v1170
        %v1176 = vmul.f32 %v1163, %v1174
        %v1177 = vmul.f32 %v1160, %v1170
        %v1178 = vmul.f32 %v1164, %v1174
        %v1179 = vmul.f32 %v1161, %v1170
        %v1180 = vmul.f32 %v1165, %v1174
        %v1181 = vmul.f32 %v1162, %v1170
        %v1182 = vmul.f32 %v1166, %v1174
        %1183 = vset.pattern.permute.xlu0 8
        %1184 = vperm.xlu0 %1183, %v585
        %v1185 = vpop.permute.xlu0 %1184
        %1187 = vset.pattern.permute.xlu0 8
        %1188 = vperm.xlu0 %1187, %v586
        %v1189 = vpop.permute.xlu0 %1188
        %1191 = vset.pattern.permute.xlu0 8
        %1192 = vperm.xlu0 %1191, %v587
        %v1193 = vpop.permute.xlu0 %1192
        %1195 = vset.pattern.permute.xlu0 8
        %1196 = vperm.xlu0 %1195, %v588
        %v1197 = vpop.permute.xlu0 %1196
        %v1199 = vmul.f32 %v1175, %v1185
        %v1200 = vmul.f32 %v1176, %v1185
        %v1201 = vmul.f32 %v1177, %v1189
        %v1202 = vmul.f32 %v1178, %v1189
        %v1203 = vmul.f32 %v1179, %v1193
        %v1204 = vmul.f32 %v1180, %v1193
        %v1205 = vmul.f32 %v1181, %v1197
        %v1206 = vmul.f32 %v1182, %v1197
        %v1207 = vadd.f32 %v1134, %v1199
        %v1208 = vadd.f32 %v1135, %v1200
        %v1209 = vadd.f32 %v1136, %v1201
        %v1210 = vadd.f32 %v1137, %v1202
        %v1211 = vadd.f32 %v1138, %v1203
        %v1212 = vadd.f32 %v1139, %v1204
        %v1213 = vadd.f32 %v1140, %v1205
        %v1214 = vadd.f32 %v1141, %v1206
        %v1215 = vld [vmem:[%s5] sm:$0xff]
        %v1216 = vld [vmem:[%s5 + $0x8] sm:$0xff]
        %v1217 = vld [vmem:[%s5 + $0x10] sm:$0xff]
        %v1218 = vld [vmem:[%s5 + $0x18] sm:$0xff]
        %1220 = vset.pattern.permute.xlu0 0
        %1221 = vperm.xlu0 %1220, %v1215
        %v1222 = vpop.permute.xlu0 %1221
        %1225 = vset.pattern.permute.xlu0 0
        %1226 = vperm.xlu0 %1225, %v1216
        %v1227 = vpop.permute.xlu0 %1226
        %1230 = vset.pattern.permute.xlu0 0
        %1231 = vperm.xlu0 %1230, %v1217
        %v1232 = vpop.permute.xlu0 %1231
        %1235 = vset.pattern.permute.xlu0 0
        %1236 = vperm.xlu0 %1235, %v1218
        %v1237 = vpop.permute.xlu0 %1236
        %v1239 = vadd.f32 %v1207, %v1222
        %v1240 = vadd.f32 %v1208, %v1222
        %v1241 = vadd.f32 %v1209, %v1227
        %v1242 = vadd.f32 %v1210, %v1227
        %v1243 = vadd.f32 %v1211, %v1232
        %v1244 = vadd.f32 %v1212, %v1232
        %v1245 = vadd.f32 %v1213, %v1237
        %v1246 = vadd.f32 %v1214, %v1237
        %v1247 = vmax.f32 %v1239, 0.0
        %v1248 = vmax.f32 %v1240, 0.0
        %v1249 = vmax.f32 %v1241, 0.0
        %v1250 = vmax.f32 %v1242, 0.0
        %v1251 = vmax.f32 %v1243, 0.0
        %v1252 = vmax.f32 %v1244, 0.0
        %v1253 = vmax.f32 %v1245, 0.0
        %v1254 = vmax.f32 %v1246, 0.0
        %v1255 = vmin.f32 %v1247, 6.0
        %v1256 = vmin.f32 %v1248, 6.0
        %v1257 = vmin.f32 %v1249, 6.0
        %v1258 = vmin.f32 %v1250, 6.0
        %v1259 = vmin.f32 %v1251, 6.0
        %v1260 = vmin.f32 %v1252, 6.0
        %v1261 = vmin.f32 %v1253, 6.0
        %v1262 = vmin.f32 %v1254, 6.0
        %v1263 = vld [vmem:[%s6] sm:$0x3]
        %v1264 = vpack.c.bf16 %v1257, %v1255
        %v1265 = vpack.c.bf16 %v1258, %v1256
        %v1266 = vpack.c.bf16 %v1261, %v1259
        %v1267 = vpack.c.bf16 %v1262, %v1260
        %v1268 = vld [vmem:[%s7] sm:$0xf]
        %1270 = vset.pattern.permute.xlu0 0
        %1271 = vperm.xlu0 %1270, %v1268
        %v1272 = vpop.permute.xlu0 %1271
        %vm1274 = vcmask 261120
        %v1276 = vsel %vm1274, %v1263, 0
        %1278 = vmatprep.subr.bf16.mxu0 %v1265
        %1279 = vmatpush1.bf16.msra.mxu0 %v1264
        %1280 = vmatprep.subr.bf16.mxu0 %v1267
        %1281 = vmatpush1.bf16.msra.mxu0 %v1266
        %1282 = vmatprep.subr.bf16.mxu0 0
        %1283 = vmatpush1.bf16.msra.mxu0 0
        %1284 = vmatprep.subr.bf16.mxu0 0
        %1285 = vmatpush1.bf16.msra.mxu0 0
        %1286 = vmatprep.subr.bf16.mxu0 0
        %1287 = vmatpush1.bf16.msra.mxu0 0
        %1288 = vmatprep.subr.bf16.mxu0 0
        %1289 = vmatpush1.bf16.msra.mxu0 0
        %1290 = vmatprep.subr.bf16.mxu0 0
        %1291 = vmatpush1.bf16.msra.mxu0 0
        %1292 = vmatprep.subr.bf16.mxu0 0
        %1293 = vmatpush1.bf16.msra.mxu0 0
        %1294 = vmatprep.subr.bf16.mxu0 0
        %1295 = vmatpush1.bf16.msra.mxu0 0
        %1296 = vmatprep.subr.bf16.mxu0 0
        %1297 = vmatpush1.bf16.msra.mxu0 0
        %1298 = vmatprep.subr.bf16.mxu0 0
        %1299 = vmatpush1.bf16.msra.mxu0 0
        %1300 = vmatprep.subr.bf16.mxu0 0
        %1301 = vmatpush1.bf16.msra.mxu0 0
        %1302 = vmatprep.subr.bf16.mxu0 0
        %1303 = vmatpush1.bf16.msra.mxu0 0
        %1304 = vmatprep.subr.bf16.mxu0 0
        %1305 = vmatpush1.bf16.msra.mxu0 0
        %1306 = vmatprep.subr.bf16.mxu0 0
        %1307 = vmatpush1.bf16.msra.mxu0 0
        %1308 = vmatprep.subr.bf16.mxu0 0
        %1309 = vmatpush1.bf16.msra.mxu0 0
        %1310 = vmatprep.mubr.bf16.mxu0 0
        %1311 = vmatmul.mubr.bf16.gmra.mrb[0].mxu0 %v1276
        %v1312 = vpop.f32.mrb[0].mxu0
        %v1313 = vadd.f32 %v1272, %v1312
        %v1314 = vpop.f32.mrb[0].mxu0
        %v1315 = vadd.f32 %v1272, %v1314
        %v1316 = vpop.f32.mrb[0].mxu0
        %v1317 = vpop.f32.mrb[0].mxu0
        %1318 = vdwg.mxu0
        %v1319 = vsub.f32 0.0, %v1313
        %v1320 = vsub.f32 0.0, %v1315
        %v1321 = vmul.f32 %v1319, 1.442695
        %v1322 = vpow.pop %v1321
        %v1323 = vmul.f32 %v1320, 1.442695
        %v1324 = vpow.pop %v1323
        %v1325 = vadd.f32 %v1322, 1.0
        %v1326 = vadd.f32 %v1324, 1.0
        %v1327 = vrcp.pop %v1325
        %v1328 = vrcp.pop %v1326
        %v1329 = vsub.f32 %v365, %v366
        %v1331 = vcombine.high %v1329, %v1329
        %v1333 = vmul.f32 %v1327, %v1329
        %v1334 = vmul.f32 %v1328, %v1331
        %v1337 = vcombine.low %v1333, %v1334
        %v1339 = vadd.f32 %v366, %v1337
        %1340 = vst [vmem:[#allocation2] sm:$0xff] %v1339
        %1341 = vst [vmem:[%s349] sm:$0xff] %v1339
        %s1342 = sand.u32 %s241, 1
        %s1343 = scalar_lea.sflag [#allocation4], %s1342
        %s1344 = sand.u32 %s241, 1
        %s1345 = smul.addr %s1344, 8
        %s1346 = scalar_lea.vmem [#allocation3], %s1345
        // Predicated region
        $region61: #{tpu_custom_call.1} parent=55 // pred_check
          %p1347 = pneg %p251
        $region62: #{tpu_custom_call.1} parent=55 // pred_check_branch
          %1349 = sbr.rel (%p1347) target = $region64
        $region63: #{tpu_custom_call.1} parent=55 // pred_region
          %s1351 = ssub.s32 128, 128
          %1352 = vsyncadd %s1343, %s1351
          %s1353 = smul.addr %s28, 2
          %s1354 = smul.addr %s27, 16
          %s1355 = sadd.s32 %s1353, %s1354
          %s1356 = smul.addr %s1355, 64
          %s1357 = scalar_lea.hbm %s9, %s1356
          %s1359 = sshll.u32 %s1346, 4
          %s1360 = int_to_ptr.vmem [resolvable:$true] %s1359
          %1362 = dma.vmem_to_hbm [thread:$0]  %s1360, 128, %s1357, %s1343
        $region64: #{tpu_custom_call.1} parent=55 // pred_fallthru
          _
      $region56: #{tpu_custom_call.1} parent=5 // pred_fallthru
        _
      %p1363 = scmp.le.s32.totalorder 2, %s18
      // Predicated region
      $region65: #{tpu_custom_call.1} parent=5 // pred_check
        %p1364 = pneg %p1363
      $region66: #{tpu_custom_call.1} parent=5 // pred_check_branch
        %1366 = sbr.rel (%p1364) target = $region68
      $region67: #{tpu_custom_call.1} parent=5 // pred_region
        %s1367 = ssub.s32 %s18, 2
        // Predicated region
        $region69: #{tpu_custom_call.1} parent=67 // pred_check
          %p1368 = pneg %p257
        $region70: #{tpu_custom_call.1} parent=67 // pred_check_branch
          %1370 = sbr.rel (%p1368) target = $region72
        $region71: #{tpu_custom_call.1} parent=67 // pred_region
          %s1371 = sand.u32 %s242, 1
          %s1372 = scalar_lea.sflag [#allocation4], %s1371
          %s1373 = sand.u32 %s242, 1
          %s1374 = smul.addr %s1373, 8
          %s1375 = scalar_lea.vmem [#allocation3], %s1374
          %1376 = dma.done %s1372, 128
        $region72: #{tpu_custom_call.1} parent=67 // pred_fallthru
          _
      $region68: #{tpu_custom_call.1} parent=5 // pred_fallthru
        _
    $region6: #{tpu_custom_call.1} parent=1 // loop_footer
      %s22 = sadd.s32 1, %s18
    $region7: #{tpu_custom_call.1} parent=1 // loop_footer_branch
      %17 = sbr.rel target = $region3
    $region8: #{tpu_custom_call.1} parent=1 // loop_exit
      _
    %1377 = vsyncpa [#allocation4], 1
    %s1378 = scalar_lea.sflag [#allocation4], 1
    %1379 = vsyncpa %s1378, 1

</llo_original>
